<compile_context>
chip_gen: v7x
topology: tpu7x:2x2x1
jax: 0.10.0
libtpu: 0.0.40
codegen_flags: <defaults>
</compile_context>

<pallas_src>
import functools

import jax
import jax.numpy as jnp
import numpy as np
from jax import lax
from jax.experimental import pallas as pl
from jax.experimental.pallas import tpu as pltpu


def _bitonic_sort_lastdim(v):
    """Ascending sort of each row along the last (lane) axis; last dim must be a power of two.

    Control masks depend only on the lane index, so they are built at shape (1, N) (iota hoisted
    out of the stage loops, take_min pre-combined per (k, j)) and broadcast against the
    (rows, N) data — the full-width work per stage is just 2 rolls + min + max + 2 selects.
    """
    n = v.shape[-1]
    assert n & (n - 1) == 0, "bitonic sort needs a power-of-two length"
    axis = v.ndim - 1
    idx = lax.broadcasted_iota(jnp.int32, (1, n), 1)      # lane index, (1, N), hoisted
    k = 2
    while k <= n:
        j = k // 2
        while j >= 1:
            upper_half = (idx & j) == 0                   # partner index = i + j (no carry)
            ascending = (idx & k) == 0
            take_min = upper_half == ascending            # == not xor(upper_half, ascending)
            partner = jnp.where(
                upper_half,
                pltpu.roll(v, (n - j) % n, axis=axis),    # v[i + j]
                pltpu.roll(v, j, axis=axis),              # v[i - j]
            )
            v = jnp.where(take_min, jnp.minimum(v, partner), jnp.maximum(v, partner))
            j //= 2
        k *= 2
    return v


def _gswd_kernel(x_ref, y_ref, proj_ref, out_ref, *, p_type):
    # x_ref / y_ref block: (1, dim, N); proj_ref block: (1, P_tile, dim); out block: (1,1,1,1).
    dim = x_ref.shape[1]
    n = x_ref.shape[2]
    pt = proj_ref.shape[1]

    x = x_ref[0]            # (dim, N)
    y = y_ref[0]
    pr = proj_ref[0]        # (P_tile, dim); already scaled by r for the 'circular' p_type

    def project(pts):
        # Contraction dim is tiny (3) -> unroll on the VPU (MXU would be padded 3 -> 128).
        # TODO(synk): for very large num_projs, offload this projection to the (idle) MXU.
        acc = None
        for c in range(dim):
            col = pr[:, c:c + 1]          # (P_tile, 1)
            row = pts[c:c + 1, :]         # (1, N)
            if p_type == "linear":
                term = col * row
            else:                         # 'circular': torch.cdist(pts, proj * r, p=2)
                d = col - row
                term = d * d
            acc = term if acc is None else acc + term
        return acc if p_type == "linear" else jnp.sqrt(acc)

    xproj = project(x)                    # (P_tile, N)
    yproj = project(y)

    # Single bitonic pass over x- and y-projections stacked on sublanes (halves sort work).
    if pt % 8 == 0:
        both = _bitonic_sort_lastdim(jnp.concatenate([xproj, yproj], axis=0))  # (2*P_tile, N)
        xs, ys = both[:pt], both[pt:]
    else:
        xs = _bitonic_sort_lastdim(xproj)
        ys = _bitonic_sort_lastdim(yproj)
    diff = xs - ys

    # degree = 2.0 (PyTorch default): mean over points and this projection tile of |diff|^2,
    # fully reduced in-kernel so the output is one scalar per grid step (no lane-sparse slab).
    d2 = diff * diff
    m = jnp.sum(jnp.sum(d2, axis=1, keepdims=True), axis=0, keepdims=True)     # (1, 1)
    out_ref[0, 0] = m * (1.0 / (pt * n))


def _make_projections(key, batch, num_projs, dim):
    pr = jax.random.normal(key, (batch, num_projs, dim), dtype=jnp.float32)
    return pr / jnp.sqrt(jnp.sum(pr * pr, axis=2, keepdims=True))


def _pick_p_tile(num_projs, n):
    """Tile num_projs so the (2*P_tile, N) f32 sort working set stays ~within the vreg file."""
    budget = max(8, 32768 // max(n, 1))        # 2 * P_tile * N * 4B <= ~256 KiB
    t = min(num_projs, budget)
    t = max(8, (t // 8) * 8)
    while t >= 8:
        if num_projs % t == 0:                 # must divide P and be a multiple of 8
            return t
        t -= 8
    return num_projs                           # fall back to a single projection block


def gswd_loss(x, y, *, num_projs, r, p_type, key, p_tile=None):
    """x, y: [batch, num_points, dim] (PyTorch convention). Returns {'loss': scalar}."""
    assert p_type in ("linear", "circular")
    B, N, D = x.shape
    assert N & (N - 1) == 0, "in-kernel bitonic sort needs a power-of-two point count"
    # TODO(synk): support arbitrary N by padding to the next power of two with +inf sentinels
    #             and masking the padded lanes out of the point-mean (divide by the true N).

    xt = jnp.transpose(x.astype(jnp.float32), (0, 2, 1))   # layout: [B, dim, N] (N on lanes)
    yt = jnp.transpose(y.astype(jnp.float32), (0, 2, 1))
    proj = _make_projections(key, B, num_projs, D)
    if p_type == "circular":
        proj = proj * jnp.float32(r)                        # pre-scale by r in the wrapper

    pt = p_tile if p_tile is not None else _pick_p_tile(num_projs, N)
    assert num_projs % pt == 0
    npb = num_projs // pt

    m = pl.pallas_call(
        functools.partial(_gswd_kernel, p_type=p_type),
        out_shape=jax.ShapeDtypeStruct((B, npb, 1, 1), jnp.float32),
        grid_spec=pltpu.PrefetchScalarGridSpec(
            num_scalar_prefetch=0,
            grid=(B, npb),                                   # P on the grid bounds vreg/VMEM use
            in_specs=[
                pl.BlockSpec((1, D, N), lambda b, p: (b, 0, 0)),
                pl.BlockSpec((1, D, N), lambda b, p: (b, 0, 0)),
                pl.BlockSpec((1, pt, D), lambda b, p: (b, p, 0)),
            ],
            out_specs=pl.BlockSpec((1, 1, 1, 1), lambda b, p: (b, p, 0, 0)),
        ),
        compiler_params=pltpu.CompilerParams(
            dimension_semantics=("parallel", "parallel"),    # megacore over batch and proj tiles
            vmem_limit_bytes=48 * 1024 * 1024,               # explicit, under v7x 64 MiB physical
        ),
    )(xt, yt, proj)

    per_batch = jnp.mean(m[:, :, 0, 0], axis=1)     # mean over all projections of mean_n |d|^2
    first_moment = jnp.sqrt(per_batch)              # degree = 2.0 -> pow(1/degree) == sqrt
    return {"loss": jnp.asarray(N, jnp.float32) * jnp.mean(first_moment)}


def _reference_loss(x, y, proj, r, p_type):
    """Pure-JAX transcription of compute_practical_moments_sw + GSWD.forward (degree = 2.0)."""
    x = x.astype(jnp.float32)
    y = y.astype(jnp.float32)
    if p_type == "linear":
        xproj = jnp.einsum("bnd,bpd->bnp", x, proj)
        yproj = jnp.einsum("bnd,bpd->bnp", y, proj)
    else:
        xproj = jnp.sqrt(jnp.sum((x[:, :, None, :] - r * proj[:, None, :, :]) ** 2, axis=-1))
        yproj = jnp.sqrt(jnp.sum((y[:, :, None, :] - r * proj[:, None, :, :]) ** 2, axis=-1))
    s = (jnp.sort(jnp.transpose(xproj, (0, 2, 1)), axis=-1)
         - jnp.sort(jnp.transpose(yproj, (0, 2, 1)), axis=-1))
    msum = jnp.mean(jnp.abs(s) ** 2.0, axis=2)
    first_moment = jnp.mean(msum, axis=1) ** 0.5
    return x.shape[1] * jnp.mean(first_moment)


if __name__ == "__main__":
    B, N, D = 2, 128, 3
    num_projs, r = 16, 0.5

    key = jax.random.PRNGKey(0)
    kx, ky, kp = jax.random.split(key, 3)
    x = jax.random.normal(kx, (B, N, D), dtype=jnp.float32)
    y = jax.random.normal(ky, (B, N, D), dtype=jnp.float32)

    # Same projections for kernel and reference (both derived deterministically from kp).
    proj = _make_projections(kp, B, num_projs, D)

    for p_type in ("linear", "circular"):
        out = gswd_loss(x, y, num_projs=num_projs, r=r, p_type=p_type, key=kp)
        loss = jax.block_until_ready(out["loss"])
        ref = jax.block_until_ready(_reference_loss(x, y, proj, r, p_type))
        np.testing.assert_allclose(np.asarray(loss), np.asarray(ref), rtol=2e-3, atol=2e-3)

    print("KERNEL_OK")
</pallas_src>

<mosaic_0001>
module attributes {stable_mosaic.version = 11 : i64} {
  func.func @_gswd_kernel(%arg0: i32, %arg1: i32, %arg2: memref<1x3x128xf32, #tpu.memory_space<vmem>>, %arg3: memref<1x3x128xf32, #tpu.memory_space<vmem>>, %arg4: memref<1x16x3xf32, #tpu.memory_space<vmem>>, %arg5: memref<1x1x1x1xf32, #tpu.memory_space<vmem>>) attributes {dimension_semantics = [#tpu.dimension_semantics<parallel>, #tpu.dimension_semantics<parallel>], iteration_bounds = array<i64: 2, 1>, scalar_prefetch = 0 : i64, scratch_operands = 0 : i64, tpu.core_type = #tpu.core_type<tc>, window_params = [{transform_indices = @transform_0, window_bounds = array<i64: 1, 3, 128>}, {transform_indices = @transform_1, window_bounds = array<i64: 1, 3, 128>}, {transform_indices = @transform_2, window_bounds = array<i64: 1, 16, 3>}, {transform_indices = @transform_3, window_bounds = array<i64: 1, 1, 1, 1>}]} {
    %c0 = arith.constant 0 : index
    %c0_0 = arith.constant 0 : index
    %c0_1 = arith.constant 0 : index
    %0 = vector.load %arg2[%c0, %c0_0, %c0_1] : memref<1x3x128xf32, #tpu.memory_space<vmem>>, vector<1x3x128xf32>
    %1 = vector.shape_cast %0 : vector<1x3x128xf32> to vector<3x128xf32>
    %c0_2 = arith.constant 0 : index
    %c0_3 = arith.constant 0 : index
    %c0_4 = arith.constant 0 : index
    %2 = vector.load %arg3[%c0_2, %c0_3, %c0_4] : memref<1x3x128xf32, #tpu.memory_space<vmem>>, vector<1x3x128xf32>
    %3 = vector.shape_cast %2 : vector<1x3x128xf32> to vector<3x128xf32>
    %c0_5 = arith.constant 0 : index
    %c0_6 = arith.constant 0 : index
    %c0_7 = arith.constant 0 : index
    %4 = vector.load %arg4[%c0_5, %c0_6, %c0_7] : memref<1x16x3xf32, #tpu.memory_space<vmem>>, vector<1x16x3xf32>
    %5 = vector.shape_cast %4 : vector<1x16x3xf32> to vector<16x3xf32>
    %6 = vector.extract_strided_slice %5 {offsets = [0, 0], sizes = [16, 1], strides = [1, 1]} : vector<16x3xf32> to vector<16x1xf32>
    %7 = vector.extract_strided_slice %1 {offsets = [0, 0], sizes = [1, 128], strides = [1, 1]} : vector<3x128xf32> to vector<1x128xf32>
    %8 = vector.broadcast %6 : vector<16x1xf32> to vector<16x128xf32>
    %9 = vector.broadcast %7 : vector<1x128xf32> to vector<16x128xf32>
    %10 = arith.mulf %8, %9 : vector<16x128xf32>
    %11 = vector.extract_strided_slice %5 {offsets = [0, 1], sizes = [16, 1], strides = [1, 1]} : vector<16x3xf32> to vector<16x1xf32>
    %12 = vector.extract_strided_slice %1 {offsets = [1, 0], sizes = [1, 128], strides = [1, 1]} : vector<3x128xf32> to vector<1x128xf32>
    %13 = vector.broadcast %11 : vector<16x1xf32> to vector<16x128xf32>
    %14 = vector.broadcast %12 : vector<1x128xf32> to vector<16x128xf32>
    %15 = arith.mulf %13, %14 : vector<16x128xf32>
    %16 = arith.addf %10, %15 : vector<16x128xf32>
    %17 = vector.extract_strided_slice %5 {offsets = [0, 2], sizes = [16, 1], strides = [1, 1]} : vector<16x3xf32> to vector<16x1xf32>
    %18 = vector.extract_strided_slice %1 {offsets = [2, 0], sizes = [1, 128], strides = [1, 1]} : vector<3x128xf32> to vector<1x128xf32>
    %19 = vector.broadcast %17 : vector<16x1xf32> to vector<16x128xf32>
    %20 = vector.broadcast %18 : vector<1x128xf32> to vector<16x128xf32>
    %21 = arith.mulf %19, %20 : vector<16x128xf32>
    %22 = arith.addf %16, %21 : vector<16x128xf32>
    %23 = vector.extract_strided_slice %5 {offsets = [0, 0], sizes = [16, 1], strides = [1, 1]} : vector<16x3xf32> to vector<16x1xf32>
    %24 = vector.extract_strided_slice %3 {offsets = [0, 0], sizes = [1, 128], strides = [1, 1]} : vector<3x128xf32> to vector<1x128xf32>
    %25 = vector.broadcast %23 : vector<16x1xf32> to vector<16x128xf32>
    %26 = vector.broadcast %24 : vector<1x128xf32> to vector<16x128xf32>
    %27 = arith.mulf %25, %26 : vector<16x128xf32>
    %28 = vector.extract_strided_slice %5 {offsets = [0, 1], sizes = [16, 1], strides = [1, 1]} : vector<16x3xf32> to vector<16x1xf32>
    %29 = vector.extract_strided_slice %3 {offsets = [1, 0], sizes = [1, 128], strides = [1, 1]} : vector<3x128xf32> to vector<1x128xf32>
    %30 = vector.broadcast %28 : vector<16x1xf32> to vector<16x128xf32>
    %31 = vector.broadcast %29 : vector<1x128xf32> to vector<16x128xf32>
    %32 = arith.mulf %30, %31 : vector<16x128xf32>
    %33 = arith.addf %27, %32 : vector<16x128xf32>
    %34 = vector.extract_strided_slice %5 {offsets = [0, 2], sizes = [16, 1], strides = [1, 1]} : vector<16x3xf32> to vector<16x1xf32>
    %35 = vector.extract_strided_slice %3 {offsets = [2, 0], sizes = [1, 128], strides = [1, 1]} : vector<3x128xf32> to vector<1x128xf32>
    %36 = vector.broadcast %34 : vector<16x1xf32> to vector<16x128xf32>
    %37 = vector.broadcast %35 : vector<1x128xf32> to vector<16x128xf32>
    %38 = arith.mulf %36, %37 : vector<16x128xf32>
    %39 = arith.addf %33, %38 : vector<16x128xf32>
    %40 = tpu.concatenate %22, %39 in 0 : vector<16x128xf32>, vector<16x128xf32> -> vector<32x128xf32>
    %41 = tpu.iota {dimensions = array<i32: 1>} : vector<1x128xi32>
    %c1_i32 = arith.constant 1 : i32
    %42 = vector.broadcast %c1_i32 : i32 to vector<1x128xi32>
    %43 = arith.andi %41, %42 : vector<1x128xi32>
    %c0_i32 = arith.constant 0 : i32
    %44 = vector.broadcast %c0_i32 : i32 to vector<1x128xi32>
    %45 = arith.cmpi eq, %43, %44 : vector<1x128xi32>
    %c2_i32 = arith.constant 2 : i32
    %46 = vector.broadcast %c2_i32 : i32 to vector<1x128xi32>
    %47 = arith.andi %41, %46 : vector<1x128xi32>
    %c0_i32_8 = arith.constant 0 : i32
    %48 = vector.broadcast %c0_i32_8 : i32 to vector<1x128xi32>
    %49 = arith.cmpi eq, %47, %48 : vector<1x128xi32>
    %50 = arith.xori %45, %49 : vector<1x128xi1>
    %cst = arith.constant dense<true> : vector<1x128xi1>
    %51 = arith.xori %50, %cst : vector<1x128xi1>
    %c127_i32 = arith.constant 127 : i32
    %52 = tpu.dynamic_rotate %40 by %c127_i32 dim 1 : vector<32x128xf32>, i32 -> vector<32x128xf32>
    %c1_i32_9 = arith.constant 1 : i32
    %53 = tpu.dynamic_rotate %40 by %c1_i32_9 dim 1 : vector<32x128xf32>, i32 -> vector<32x128xf32>
    %54 = vector.shape_cast %45 : vector<1x128xi1> to vector<1x128xi1>
    %55 = vector.broadcast %54 : vector<1x128xi1> to vector<32x128xi1>
    %56 = arith.select %55, %52, %53 : vector<32x128xi1>, vector<32x128xf32>
    %57 = arith.minimumf %40, %56 : vector<32x128xf32>
    %58 = arith.maximumf %40, %56 : vector<32x128xf32>
    %59 = vector.shape_cast %51 : vector<1x128xi1> to vector<1x128xi1>
    %60 = vector.broadcast %59 : vector<1x128xi1> to vector<32x128xi1>
    %61 = arith.select %60, %57, %58 : vector<32x128xi1>, vector<32x128xf32>
    %c2_i32_10 = arith.constant 2 : i32
    %62 = vector.broadcast %c2_i32_10 : i32 to vector<1x128xi32>
    %63 = arith.andi %41, %62 : vector<1x128xi32>
    %c0_i32_11 = arith.constant 0 : i32
    %64 = vector.broadcast %c0_i32_11 : i32 to vector<1x128xi32>
    %65 = arith.cmpi eq, %63, %64 : vector<1x128xi32>
    %c4_i32 = arith.constant 4 : i32
    %66 = vector.broadcast %c4_i32 : i32 to vector<1x128xi32>
    %67 = arith.andi %41, %66 : vector<1x128xi32>
    %c0_i32_12 = arith.constant 0 : i32
    %68 = vector.broadcast %c0_i32_12 : i32 to vector<1x128xi32>
    %69 = arith.cmpi eq, %67, %68 : vector<1x128xi32>
    %70 = arith.xori %65, %69 : vector<1x128xi1>
    %cst_13 = arith.constant dense<true> : vector<1x128xi1>
    %71 = arith.xori %70, %cst_13 : vector<1x128xi1>
    %c126_i32 = arith.constant 126 : i32
    %72 = tpu.dynamic_rotate %61 by %c126_i32 dim 1 : vector<32x128xf32>, i32 -> vector<32x128xf32>
    %c2_i32_14 = arith.constant 2 : i32
    %73 = tpu.dynamic_rotate %61 by %c2_i32_14 dim 1 : vector<32x128xf32>, i32 -> vector<32x128xf32>
    %74 = vector.shape_cast %65 : vector<1x128xi1> to vector<1x128xi1>
    %75 = vector.broadcast %74 : vector<1x128xi1> to vector<32x128xi1>
    %76 = arith.select %75, %72, %73 : vector<32x128xi1>, vector<32x128xf32>
    %77 = arith.minimumf %61, %76 : vector<32x128xf32>
    %78 = arith.maximumf %61, %76 : vector<32x128xf32>
    %79 = vector.shape_cast %71 : vector<1x128xi1> to vector<1x128xi1>
    %80 = vector.broadcast %79 : vector<1x128xi1> to vector<32x128xi1>
    %81 = arith.select %80, %77, %78 : vector<32x128xi1>, vector<32x128xf32>
    %c1_i32_15 = arith.constant 1 : i32
    %82 = vector.broadcast %c1_i32_15 : i32 to vector<1x128xi32>
    %83 = arith.andi %41, %82 : vector<1x128xi32>
    %c0_i32_16 = arith.constant 0 : i32
    %84 = vector.broadcast %c0_i32_16 : i32 to vector<1x128xi32>
    %85 = arith.cmpi eq, %83, %84 : vector<1x128xi32>
    %c4_i32_17 = arith.constant 4 : i32
    %86 = vector.broadcast %c4_i32_17 : i32 to vector<1x128xi32>
    %87 = arith.andi %41, %86 : vector<1x128xi32>
    %c0_i32_18 = arith.constant 0 : i32
    %88 = vector.broadcast %c0_i32_18 : i32 to vector<1x128xi32>
    %89 = arith.cmpi eq, %87, %88 : vector<1x128xi32>
    %90 = arith.xori %85, %89 : vector<1x128xi1>
    %cst_19 = arith.constant dense<true> : vector<1x128xi1>
    %91 = arith.xori %90, %cst_19 : vector<1x128xi1>
    %c127_i32_20 = arith.constant 127 : i32
    %92 = tpu.dynamic_rotate %81 by %c127_i32_20 dim 1 : vector<32x128xf32>, i32 -> vector<32x128xf32>
    %c1_i32_21 = arith.constant 1 : i32
    %93 = tpu.dynamic_rotate %81 by %c1_i32_21 dim 1 : vector<32x128xf32>, i32 -> vector<32x128xf32>
    %94 = vector.shape_cast %85 : vector<1x128xi1> to vector<1x128xi1>
    %95 = vector.broadcast %94 : vector<1x128xi1> to vector<32x128xi1>
    %96 = arith.select %95, %92, %93 : vector<32x128xi1>, vector<32x128xf32>
    %97 = arith.minimumf %81, %96 : vector<32x128xf32>
    %98 = arith.maximumf %81, %96 : vector<32x128xf32>
    %99 = vector.shape_cast %91 : vector<1x128xi1> to vector<1x128xi1>
    %100 = vector.broadcast %99 : vector<1x128xi1> to vector<32x128xi1>
    %101 = arith.select %100, %97, %98 : vector<32x128xi1>, vector<32x128xf32>
    %c4_i32_22 = arith.constant 4 : i32
    %102 = vector.broadcast %c4_i32_22 : i32 to vector<1x128xi32>
    %103 = arith.andi %41, %102 : vector<1x128xi32>
    %c0_i32_23 = arith.constant 0 : i32
    %104 = vector.broadcast %c0_i32_23 : i32 to vector<1x128xi32>
    %105 = arith.cmpi eq, %103, %104 : vector<1x128xi32>
    %c8_i32 = arith.constant 8 : i32
    %106 = vector.broadcast %c8_i32 : i32 to vector<1x128xi32>
    %107 = arith.andi %41, %106 : vector<1x128xi32>
    %c0_i32_24 = arith.constant 0 : i32
    %108 = vector.broadcast %c0_i32_24 : i32 to vector<1x128xi32>
    %109 = arith.cmpi eq, %107, %108 : vector<1x128xi32>
    %110 = arith.xori %105, %109 : vector<1x128xi1>
    %cst_25 = arith.constant dense<true> : vector<1x128xi1>
    %111 = arith.xori %110, %cst_25 : vector<1x128xi1>
    %c124_i32 = arith.constant 124 : i32
    %112 = tpu.dynamic_rotate %101 by %c124_i32 dim 1 : vector<32x128xf32>, i32 -> vector<32x128xf32>
    %c4_i32_26 = arith.constant 4 : i32
    %113 = tpu.dynamic_rotate %101 by %c4_i32_26 dim 1 : vector<32x128xf32>, i32 -> vector<32x128xf32>
    %114 = vector.shape_cast %105 : vector<1x128xi1> to vector<1x128xi1>
    %115 = vector.broadcast %114 : vector<1x128xi1> to vector<32x128xi1>
    %116 = arith.select %115, %112, %113 : vector<32x128xi1>, vector<32x128xf32>
    %117 = arith.minimumf %101, %116 : vector<32x128xf32>
    %118 = arith.maximumf %101, %116 : vector<32x128xf32>
    %119 = vector.shape_cast %111 : vector<1x128xi1> to vector<1x128xi1>
    %120 = vector.broadcast %119 : vector<1x128xi1> to vector<32x128xi1>
    %121 = arith.select %120, %117, %118 : vector<32x128xi1>, vector<32x128xf32>
    %c2_i32_27 = arith.constant 2 : i32
    %122 = vector.broadcast %c2_i32_27 : i32 to vector<1x128xi32>
    %123 = arith.andi %41, %122 : vector<1x128xi32>
    %c0_i32_28 = arith.constant 0 : i32
    %124 = vector.broadcast %c0_i32_28 : i32 to vector<1x128xi32>
    %125 = arith.cmpi eq, %123, %124 : vector<1x128xi32>
    %c8_i32_29 = arith.constant 8 : i32
    %126 = vector.broadcast %c8_i32_29 : i32 to vector<1x128xi32>
    %127 = arith.andi %41, %126 : vector<1x128xi32>
    %c0_i32_30 = arith.constant 0 : i32
    %128 = vector.broadcast %c0_i32_30 : i32 to vector<1x128xi32>
    %129 = arith.cmpi eq, %127, %128 : vector<1x128xi32>
    %130 = arith.xori %125, %129 : vector<1x128xi1>
    %cst_31 = arith.constant dense<true> : vector<1x128xi1>
    %131 = arith.xori %130, %cst_31 : vector<1x128xi1>
    %c126_i32_32 = arith.constant 126 : i32
    %132 = tpu.dynamic_rotate %121 by %c126_i32_32 dim 1 : vector<32x128xf32>, i32 -> vector<32x128xf32>
    %c2_i32_33 = arith.constant 2 : i32
    %133 = tpu.dynamic_rotate %121 by %c2_i32_33 dim 1 : vector<32x128xf32>, i32 -> vector<32x128xf32>
    %134 = vector.shape_cast %125 : vector<1x128xi1> to vector<1x128xi1>
    %135 = vector.broadcast %134 : vector<1x128xi1> to vector<32x128xi1>
    %136 = arith.select %135, %132, %133 : vector<32x128xi1>, vector<32x128xf32>
    %137 = arith.minimumf %121, %136 : vector<32x128xf32>
    %138 = arith.maximumf %121, %136 : vector<32x128xf32>
    %139 = vector.shape_cast %131 : vector<1x128xi1> to vector<1x128xi1>
    %140 = vector.broadcast %139 : vector<1x128xi1> to vector<32x128xi1>
    %141 = arith.select %140, %137, %138 : vector<32x128xi1>, vector<32x128xf32>
    %c1_i32_34 = arith.constant 1 : i32
    %142 = vector.broadcast %c1_i32_34 : i32 to vector<1x128xi32>
    %143 = arith.andi %41, %142 : vector<1x128xi32>
    %c0_i32_35 = arith.constant 0 : i32
    %144 = vector.broadcast %c0_i32_35 : i32 to vector<1x128xi32>
    %145 = arith.cmpi eq, %143, %144 : vector<1x128xi32>
    %c8_i32_36 = arith.constant 8 : i32
    %146 = vector.broadcast %c8_i32_36 : i32 to vector<1x128xi32>
    %147 = arith.andi %41, %146 : vector<1x128xi32>
    %c0_i32_37 = arith.constant 0 : i32
    %148 = vector.broadcast %c0_i32_37 : i32 to vector<1x128xi32>
    %149 = arith.cmpi eq, %147, %148 : vector<1x128xi32>
    %150 = arith.xori %145, %149 : vector<1x128xi1>
    %cst_38 = arith.constant dense<true> : vector<1x128xi1>
    %151 = arith.xori %150, %cst_38 : vector<1x128xi1>
    %c127_i32_39 = arith.constant 127 : i32
    %152 = tpu.dynamic_rotate %141 by %c127_i32_39 dim 1 : vector<32x128xf32>, i32 -> vector<32x128xf32>
    %c1_i32_40 = arith.constant 1 : i32
    %153 = tpu.dynamic_rotate %141 by %c1_i32_40 dim 1 : vector<32x128xf32>, i32 -> vector<32x128xf32>
    %154 = vector.shape_cast %145 : vector<1x128xi1> to vector<1x128xi1>
    %155 = vector.broadcast %154 : vector<1x128xi1> to vector<32x128xi1>
    %156 = arith.select %155, %152, %153 : vector<32x128xi1>, vector<32x128xf32>
    %157 = arith.minimumf %141, %156 : vector<32x128xf32>
    %158 = arith.maximumf %141, %156 : vector<32x128xf32>
    %159 = vector.shape_cast %151 : vector<1x128xi1> to vector<1x128xi1>
    %160 = vector.broadcast %159 : vector<1x128xi1> to vector<32x128xi1>
    %161 = arith.select %160, %157, %158 : vector<32x128xi1>, vector<32x128xf32>
    %c8_i32_41 = arith.constant 8 : i32
    %162 = vector.broadcast %c8_i32_41 : i32 to vector<1x128xi32>
    %163 = arith.andi %41, %162 : vector<1x128xi32>
    %c0_i32_42 = arith.constant 0 : i32
    %164 = vector.broadcast %c0_i32_42 : i32 to vector<1x128xi32>
    %165 = arith.cmpi eq, %163, %164 : vector<1x128xi32>
    %c16_i32 = arith.constant 16 : i32
    %166 = vector.broadcast %c16_i32 : i32 to vector<1x128xi32>
    %167 = arith.andi %41, %166 : vector<1x128xi32>
    %c0_i32_43 = arith.constant 0 : i32
    %168 = vector.broadcast %c0_i32_43 : i32 to vector<1x128xi32>
    %169 = arith.cmpi eq, %167, %168 : vector<1x128xi32>
    %170 = arith.xori %165, %169 : vector<1x128xi1>
    %cst_44 = arith.constant dense<true> : vector<1x128xi1>
    %171 = arith.xori %170, %cst_44 : vector<1x128xi1>
    %c120_i32 = arith.constant 120 : i32
    %172 = tpu.dynamic_rotate %161 by %c120_i32 dim 1 : vector<32x128xf32>, i32 -> vector<32x128xf32>
    %c8_i32_45 = arith.constant 8 : i32
    %173 = tpu.dynamic_rotate %161 by %c8_i32_45 dim 1 : vector<32x128xf32>, i32 -> vector<32x128xf32>
    %174 = vector.shape_cast %165 : vector<1x128xi1> to vector<1x128xi1>
    %175 = vector.broadcast %174 : vector<1x128xi1> to vector<32x128xi1>
    %176 = arith.select %175, %172, %173 : vector<32x128xi1>, vector<32x128xf32>
    %177 = arith.minimumf %161, %176 : vector<32x128xf32>
    %178 = arith.maximumf %161, %176 : vector<32x128xf32>
    %179 = vector.shape_cast %171 : vector<1x128xi1> to vector<1x128xi1>
    %180 = vector.broadcast %179 : vector<1x128xi1> to vector<32x128xi1>
    %181 = arith.select %180, %177, %178 : vector<32x128xi1>, vector<32x128xf32>
    %c4_i32_46 = arith.constant 4 : i32
    %182 = vector.broadcast %c4_i32_46 : i32 to vector<1x128xi32>
    %183 = arith.andi %41, %182 : vector<1x128xi32>
    %c0_i32_47 = arith.constant 0 : i32
    %184 = vector.broadcast %c0_i32_47 : i32 to vector<1x128xi32>
    %185 = arith.cmpi eq, %183, %184 : vector<1x128xi32>
    %c16_i32_48 = arith.constant 16 : i32
    %186 = vector.broadcast %c16_i32_48 : i32 to vector<1x128xi32>
    %187 = arith.andi %41, %186 : vector<1x128xi32>
    %c0_i32_49 = arith.constant 0 : i32
    %188 = vector.broadcast %c0_i32_49 : i32 to vector<1x128xi32>
    %189 = arith.cmpi eq, %187, %188 : vector<1x128xi32>
    %190 = arith.xori %185, %189 : vector<1x128xi1>
    %cst_50 = arith.constant dense<true> : vector<1x128xi1>
    %191 = arith.xori %190, %cst_50 : vector<1x128xi1>
    %c124_i32_51 = arith.constant 124 : i32
    %192 = tpu.dynamic_rotate %181 by %c124_i32_51 dim 1 : vector<32x128xf32>, i32 -> vector<32x128xf32>
    %c4_i32_52 = arith.constant 4 : i32
    %193 = tpu.dynamic_rotate %181 by %c4_i32_52 dim 1 : vector<32x128xf32>, i32 -> vector<32x128xf32>
    %194 = vector.shape_cast %185 : vector<1x128xi1> to vector<1x128xi1>
    %195 = vector.broadcast %194 : vector<1x128xi1> to vector<32x128xi1>
    %196 = arith.select %195, %192, %193 : vector<32x128xi1>, vector<32x128xf32>
    %197 = arith.minimumf %181, %196 : vector<32x128xf32>
    %198 = arith.maximumf %181, %196 : vector<32x128xf32>
    %199 = vector.shape_cast %191 : vector<1x128xi1> to vector<1x128xi1>
    %200 = vector.broadcast %199 : vector<1x128xi1> to vector<32x128xi1>
    %201 = arith.select %200, %197, %198 : vector<32x128xi1>, vector<32x128xf32>
    %c2_i32_53 = arith.constant 2 : i32
    %202 = vector.broadcast %c2_i32_53 : i32 to vector<1x128xi32>
    %203 = arith.andi %41, %202 : vector<1x128xi32>
    %c0_i32_54 = arith.constant 0 : i32
    %204 = vector.broadcast %c0_i32_54 : i32 to vector<1x128xi32>
    %205 = arith.cmpi eq, %203, %204 : vector<1x128xi32>
    %c16_i32_55 = arith.constant 16 : i32
    %206 = vector.broadcast %c16_i32_55 : i32 to vector<1x128xi32>
    %207 = arith.andi %41, %206 : vector<1x128xi32>
    %c0_i32_56 = arith.constant 0 : i32
    %208 = vector.broadcast %c0_i32_56 : i32 to vector<1x128xi32>
    %209 = arith.cmpi eq, %207, %208 : vector<1x128xi32>
    %210 = arith.xori %205, %209 : vector<1x128xi1>
    %cst_57 = arith.constant dense<true> : vector<1x128xi1>
    %211 = arith.xori %210, %cst_57 : vector<1x128xi1>
    %c126_i32_58 = arith.constant 126 : i32
    %212 = tpu.dynamic_rotate %201 by %c126_i32_58 dim 1 : vector<32x128xf32>, i32 -> vector<32x128xf32>
    %c2_i32_59 = arith.constant 2 : i32
    %213 = tpu.dynamic_rotate %201 by %c2_i32_59 dim 1 : vector<32x128xf32>, i32 -> vector<32x128xf32>
    %214 = vector.shape_cast %205 : vector<1x128xi1> to vector<1x128xi1>
    %215 = vector.broadcast %214 : vector<1x128xi1> to vector<32x128xi1>
    %216 = arith.select %215, %212, %213 : vector<32x128xi1>, vector<32x128xf32>
    %217 = arith.minimumf %201, %216 : vector<32x128xf32>
    %218 = arith.maximumf %201, %216 : vector<32x128xf32>
    %219 = vector.shape_cast %211 : vector<1x128xi1> to vector<1x128xi1>
    %220 = vector.broadcast %219 : vector<1x128xi1> to vector<32x128xi1>
    %221 = arith.select %220, %217, %218 : vector<32x128xi1>, vector<32x128xf32>
    %c1_i32_60 = arith.constant 1 : i32
    %222 = vector.broadcast %c1_i32_60 : i32 to vector<1x128xi32>
    %223 = arith.andi %41, %222 : vector<1x128xi32>
    %c0_i32_61 = arith.constant 0 : i32
    %224 = vector.broadcast %c0_i32_61 : i32 to vector<1x128xi32>
    %225 = arith.cmpi eq, %223, %224 : vector<1x128xi32>
    %c16_i32_62 = arith.constant 16 : i32
    %226 = vector.broadcast %c16_i32_62 : i32 to vector<1x128xi32>
    %227 = arith.andi %41, %226 : vector<1x128xi32>
    %c0_i32_63 = arith.constant 0 : i32
    %228 = vector.broadcast %c0_i32_63 : i32 to vector<1x128xi32>
    %229 = arith.cmpi eq, %227, %228 : vector<1x128xi32>
    %230 = arith.xori %225, %229 : vector<1x128xi1>
    %cst_64 = arith.constant dense<true> : vector<1x128xi1>
    %231 = arith.xori %230, %cst_64 : vector<1x128xi1>
    %c127_i32_65 = arith.constant 127 : i32
    %232 = tpu.dynamic_rotate %221 by %c127_i32_65 dim 1 : vector<32x128xf32>, i32 -> vector<32x128xf32>
    %c1_i32_66 = arith.constant 1 : i32
    %233 = tpu.dynamic_rotate %221 by %c1_i32_66 dim 1 : vector<32x128xf32>, i32 -> vector<32x128xf32>
    %234 = vector.shape_cast %225 : vector<1x128xi1> to vector<1x128xi1>
    %235 = vector.broadcast %234 : vector<1x128xi1> to vector<32x128xi1>
    %236 = arith.select %235, %232, %233 : vector<32x128xi1>, vector<32x128xf32>
    %237 = arith.minimumf %221, %236 : vector<32x128xf32>
    %238 = arith.maximumf %221, %236 : vector<32x128xf32>
    %239 = vector.shape_cast %231 : vector<1x128xi1> to vector<1x128xi1>
    %240 = vector.broadcast %239 : vector<1x128xi1> to vector<32x128xi1>
    %241 = arith.select %240, %237, %238 : vector<32x128xi1>, vector<32x128xf32>
    %c16_i32_67 = arith.constant 16 : i32
    %242 = vector.broadcast %c16_i32_67 : i32 to vector<1x128xi32>
    %243 = arith.andi %41, %242 : vector<1x128xi32>
    %c0_i32_68 = arith.constant 0 : i32
    %244 = vector.broadcast %c0_i32_68 : i32 to vector<1x128xi32>
    %245 = arith.cmpi eq, %243, %244 : vector<1x128xi32>
    %c32_i32 = arith.constant 32 : i32
    %246 = vector.broadcast %c32_i32 : i32 to vector<1x128xi32>
    %247 = arith.andi %41, %246 : vector<1x128xi32>
    %c0_i32_69 = arith.constant 0 : i32
    %248 = vector.broadcast %c0_i32_69 : i32 to vector<1x128xi32>
    %249 = arith.cmpi eq, %247, %248 : vector<1x128xi32>
    %250 = arith.xori %245, %249 : vector<1x128xi1>
    %cst_70 = arith.constant dense<true> : vector<1x128xi1>
    %251 = arith.xori %250, %cst_70 : vector<1x128xi1>
    %c112_i32 = arith.constant 112 : i32
    %252 = tpu.dynamic_rotate %241 by %c112_i32 dim 1 : vector<32x128xf32>, i32 -> vector<32x128xf32>
    %c16_i32_71 = arith.constant 16 : i32
    %253 = tpu.dynamic_rotate %241 by %c16_i32_71 dim 1 : vector<32x128xf32>, i32 -> vector<32x128xf32>
    %254 = vector.shape_cast %245 : vector<1x128xi1> to vector<1x128xi1>
    %255 = vector.broadcast %254 : vector<1x128xi1> to vector<32x128xi1>
    %256 = arith.select %255, %252, %253 : vector<32x128xi1>, vector<32x128xf32>
    %257 = arith.minimumf %241, %256 : vector<32x128xf32>
    %258 = arith.maximumf %241, %256 : vector<32x128xf32>
    %259 = vector.shape_cast %251 : vector<1x128xi1> to vector<1x128xi1>
    %260 = vector.broadcast %259 : vector<1x128xi1> to vector<32x128xi1>
    %261 = arith.select %260, %257, %258 : vector<32x128xi1>, vector<32x128xf32>
    %c8_i32_72 = arith.constant 8 : i32
    %262 = vector.broadcast %c8_i32_72 : i32 to vector<1x128xi32>
    %263 = arith.andi %41, %262 : vector<1x128xi32>
    %c0_i32_73 = arith.constant 0 : i32
    %264 = vector.broadcast %c0_i32_73 : i32 to vector<1x128xi32>
    %265 = arith.cmpi eq, %263, %264 : vector<1x128xi32>
    %c32_i32_74 = arith.constant 32 : i32
    %266 = vector.broadcast %c32_i32_74 : i32 to vector<1x128xi32>
    %267 = arith.andi %41, %266 : vector<1x128xi32>
    %c0_i32_75 = arith.constant 0 : i32
    %268 = vector.broadcast %c0_i32_75 : i32 to vector<1x128xi32>
    %269 = arith.cmpi eq, %267, %268 : vector<1x128xi32>
    %270 = arith.xori %265, %269 : vector<1x128xi1>
    %cst_76 = arith.constant dense<true> : vector<1x128xi1>
    %271 = arith.xori %270, %cst_76 : vector<1x128xi1>
    %c120_i32_77 = arith.constant 120 : i32
    %272 = tpu.dynamic_rotate %261 by %c120_i32_77 dim 1 : vector<32x128xf32>, i32 -> vector<32x128xf32>
    %c8_i32_78 = arith.constant 8 : i32
    %273 = tpu.dynamic_rotate %261 by %c8_i32_78 dim 1 : vector<32x128xf32>, i32 -> vector<32x128xf32>
    %274 = vector.shape_cast %265 : vector<1x128xi1> to vector<1x128xi1>
    %275 = vector.broadcast %274 : vector<1x128xi1> to vector<32x128xi1>
    %276 = arith.select %275, %272, %273 : vector<32x128xi1>, vector<32x128xf32>
    %277 = arith.minimumf %261, %276 : vector<32x128xf32>
    %278 = arith.maximumf %261, %276 : vector<32x128xf32>
    %279 = vector.shape_cast %271 : vector<1x128xi1> to vector<1x128xi1>
    %280 = vector.broadcast %279 : vector<1x128xi1> to vector<32x128xi1>
    %281 = arith.select %280, %277, %278 : vector<32x128xi1>, vector<32x128xf32>
    %c4_i32_79 = arith.constant 4 : i32
    %282 = vector.broadcast %c4_i32_79 : i32 to vector<1x128xi32>
    %283 = arith.andi %41, %282 : vector<1x128xi32>
    %c0_i32_80 = arith.constant 0 : i32
    %284 = vector.broadcast %c0_i32_80 : i32 to vector<1x128xi32>
    %285 = arith.cmpi eq, %283, %284 : vector<1x128xi32>
    %c32_i32_81 = arith.constant 32 : i32
    %286 = vector.broadcast %c32_i32_81 : i32 to vector<1x128xi32>
    %287 = arith.andi %41, %286 : vector<1x128xi32>
    %c0_i32_82 = arith.constant 0 : i32
    %288 = vector.broadcast %c0_i32_82 : i32 to vector<1x128xi32>
    %289 = arith.cmpi eq, %287, %288 : vector<1x128xi32>
    %290 = arith.xori %285, %289 : vector<1x128xi1>
    %cst_83 = arith.constant dense<true> : vector<1x128xi1>
    %291 = arith.xori %290, %cst_83 : vector<1x128xi1>
    %c124_i32_84 = arith.constant 124 : i32
    %292 = tpu.dynamic_rotate %281 by %c124_i32_84 dim 1 : vector<32x128xf32>, i32 -> vector<32x128xf32>
    %c4_i32_85 = arith.constant 4 : i32
    %293 = tpu.dynamic_rotate %281 by %c4_i32_85 dim 1 : vector<32x128xf32>, i32 -> vector<32x128xf32>
    %294 = vector.shape_cast %285 : vector<1x128xi1> to vector<1x128xi1>
    %295 = vector.broadcast %294 : vector<1x128xi1> to vector<32x128xi1>
    %296 = arith.select %295, %292, %293 : vector<32x128xi1>, vector<32x128xf32>
    %297 = arith.minimumf %281, %296 : vector<32x128xf32>
    %298 = arith.maximumf %281, %296 : vector<32x128xf32>
    %299 = vector.shape_cast %291 : vector<1x128xi1> to vector<1x128xi1>
    %300 = vector.broadcast %299 : vector<1x128xi1> to vector<32x128xi1>
    %301 = arith.select %300, %297, %298 : vector<32x128xi1>, vector<32x128xf32>
    %c2_i32_86 = arith.constant 2 : i32
    %302 = vector.broadcast %c2_i32_86 : i32 to vector<1x128xi32>
    %303 = arith.andi %41, %302 : vector<1x128xi32>
    %c0_i32_87 = arith.constant 0 : i32
    %304 = vector.broadcast %c0_i32_87 : i32 to vector<1x128xi32>
    %305 = arith.cmpi eq, %303, %304 : vector<1x128xi32>
    %c32_i32_88 = arith.constant 32 : i32
    %306 = vector.broadcast %c32_i32_88 : i32 to vector<1x128xi32>
    %307 = arith.andi %41, %306 : vector<1x128xi32>
    %c0_i32_89 = arith.constant 0 : i32
    %308 = vector.broadcast %c0_i32_89 : i32 to vector<1x128xi32>
    %309 = arith.cmpi eq, %307, %308 : vector<1x128xi32>
    %310 = arith.xori %305, %309 : vector<1x128xi1>
    %cst_90 = arith.constant dense<true> : vector<1x128xi1>
    %311 = arith.xori %310, %cst_90 : vector<1x128xi1>
    %c126_i32_91 = arith.constant 126 : i32
    %312 = tpu.dynamic_rotate %301 by %c126_i32_91 dim 1 : vector<32x128xf32>, i32 -> vector<32x128xf32>
    %c2_i32_92 = arith.constant 2 : i32
    %313 = tpu.dynamic_rotate %301 by %c2_i32_92 dim 1 : vector<32x128xf32>, i32 -> vector<32x128xf32>
    %314 = vector.shape_cast %305 : vector<1x128xi1> to vector<1x128xi1>
    %315 = vector.broadcast %314 : vector<1x128xi1> to vector<32x128xi1>
    %316 = arith.select %315, %312, %313 : vector<32x128xi1>, vector<32x128xf32>
    %317 = arith.minimumf %301, %316 : vector<32x128xf32>
    %318 = arith.maximumf %301, %316 : vector<32x128xf32>
    %319 = vector.shape_cast %311 : vector<1x128xi1> to vector<1x128xi1>
    %320 = vector.broadcast %319 : vector<1x128xi1> to vector<32x128xi1>
    %321 = arith.select %320, %317, %318 : vector<32x128xi1>, vector<32x128xf32>
    %c1_i32_93 = arith.constant 1 : i32
    %322 = vector.broadcast %c1_i32_93 : i32 to vector<1x128xi32>
    %323 = arith.andi %41, %322 : vector<1x128xi32>
    %c0_i32_94 = arith.constant 0 : i32
    %324 = vector.broadcast %c0_i32_94 : i32 to vector<1x128xi32>
    %325 = arith.cmpi eq, %323, %324 : vector<1x128xi32>
    %c32_i32_95 = arith.constant 32 : i32
    %326 = vector.broadcast %c32_i32_95 : i32 to vector<1x128xi32>
    %327 = arith.andi %41, %326 : vector<1x128xi32>
    %c0_i32_96 = arith.constant 0 : i32
    %328 = vector.broadcast %c0_i32_96 : i32 to vector<1x128xi32>
    %329 = arith.cmpi eq, %327, %328 : vector<1x128xi32>
    %330 = arith.xori %325, %329 : vector<1x128xi1>
    %cst_97 = arith.constant dense<true> : vector<1x128xi1>
    %331 = arith.xori %330, %cst_97 : vector<1x128xi1>
    %c127_i32_98 = arith.constant 127 : i32
    %332 = tpu.dynamic_rotate %321 by %c127_i32_98 dim 1 : vector<32x128xf32>, i32 -> vector<32x128xf32>
    %c1_i32_99 = arith.constant 1 : i32
    %333 = tpu.dynamic_rotate %321 by %c1_i32_99 dim 1 : vector<32x128xf32>, i32 -> vector<32x128xf32>
    %334 = vector.shape_cast %325 : vector<1x128xi1> to vector<1x128xi1>
    %335 = vector.broadcast %334 : vector<1x128xi1> to vector<32x128xi1>
    %336 = arith.select %335, %332, %333 : vector<32x128xi1>, vector<32x128xf32>
    %337 = arith.minimumf %321, %336 : vector<32x128xf32>
    %338 = arith.maximumf %321, %336 : vector<32x128xf32>
    %339 = vector.shape_cast %331 : vector<1x128xi1> to vector<1x128xi1>
    %340 = vector.broadcast %339 : vector<1x128xi1> to vector<32x128xi1>
    %341 = arith.select %340, %337, %338 : vector<32x128xi1>, vector<32x128xf32>
    %c32_i32_100 = arith.constant 32 : i32
    %342 = vector.broadcast %c32_i32_100 : i32 to vector<1x128xi32>
    %343 = arith.andi %41, %342 : vector<1x128xi32>
    %c0_i32_101 = arith.constant 0 : i32
    %344 = vector.broadcast %c0_i32_101 : i32 to vector<1x128xi32>
    %345 = arith.cmpi eq, %343, %344 : vector<1x128xi32>
    %c64_i32 = arith.constant 64 : i32
    %346 = vector.broadcast %c64_i32 : i32 to vector<1x128xi32>
    %347 = arith.andi %41, %346 : vector<1x128xi32>
    %c0_i32_102 = arith.constant 0 : i32
    %348 = vector.broadcast %c0_i32_102 : i32 to vector<1x128xi32>
    %349 = arith.cmpi eq, %347, %348 : vector<1x128xi32>
    %350 = arith.xori %345, %349 : vector<1x128xi1>
    %cst_103 = arith.constant dense<true> : vector<1x128xi1>
    %351 = arith.xori %350, %cst_103 : vector<1x128xi1>
    %c96_i32 = arith.constant 96 : i32
    %352 = tpu.dynamic_rotate %341 by %c96_i32 dim 1 : vector<32x128xf32>, i32 -> vector<32x128xf32>
    %c32_i32_104 = arith.constant 32 : i32
    %353 = tpu.dynamic_rotate %341 by %c32_i32_104 dim 1 : vector<32x128xf32>, i32 -> vector<32x128xf32>
    %354 = vector.shape_cast %345 : vector<1x128xi1> to vector<1x128xi1>
    %355 = vector.broadcast %354 : vector<1x128xi1> to vector<32x128xi1>
    %356 = arith.select %355, %352, %353 : vector<32x128xi1>, vector<32x128xf32>
    %357 = arith.minimumf %341, %356 : vector<32x128xf32>
    %358 = arith.maximumf %341, %356 : vector<32x128xf32>
    %359 = vector.shape_cast %351 : vector<1x128xi1> to vector<1x128xi1>
    %360 = vector.broadcast %359 : vector<1x128xi1> to vector<32x128xi1>
    %361 = arith.select %360, %357, %358 : vector<32x128xi1>, vector<32x128xf32>
    %c16_i32_105 = arith.constant 16 : i32
    %362 = vector.broadcast %c16_i32_105 : i32 to vector<1x128xi32>
    %363 = arith.andi %41, %362 : vector<1x128xi32>
    %c0_i32_106 = arith.constant 0 : i32
    %364 = vector.broadcast %c0_i32_106 : i32 to vector<1x128xi32>
    %365 = arith.cmpi eq, %363, %364 : vector<1x128xi32>
    %c64_i32_107 = arith.constant 64 : i32
    %366 = vector.broadcast %c64_i32_107 : i32 to vector<1x128xi32>
    %367 = arith.andi %41, %366 : vector<1x128xi32>
    %c0_i32_108 = arith.constant 0 : i32
    %368 = vector.broadcast %c0_i32_108 : i32 to vector<1x128xi32>
    %369 = arith.cmpi eq, %367, %368 : vector<1x128xi32>
    %370 = arith.xori %365, %369 : vector<1x128xi1>
    %cst_109 = arith.constant dense<true> : vector<1x128xi1>
    %371 = arith.xori %370, %cst_109 : vector<1x128xi1>
    %c112_i32_110 = arith.constant 112 : i32
    %372 = tpu.dynamic_rotate %361 by %c112_i32_110 dim 1 : vector<32x128xf32>, i32 -> vector<32x128xf32>
    %c16_i32_111 = arith.constant 16 : i32
    %373 = tpu.dynamic_rotate %361 by %c16_i32_111 dim 1 : vector<32x128xf32>, i32 -> vector<32x128xf32>
    %374 = vector.shape_cast %365 : vector<1x128xi1> to vector<1x128xi1>
    %375 = vector.broadcast %374 : vector<1x128xi1> to vector<32x128xi1>
    %376 = arith.select %375, %372, %373 : vector<32x128xi1>, vector<32x128xf32>
    %377 = arith.minimumf %361, %376 : vector<32x128xf32>
    %378 = arith.maximumf %361, %376 : vector<32x128xf32>
    %379 = vector.shape_cast %371 : vector<1x128xi1> to vector<1x128xi1>
    %380 = vector.broadcast %379 : vector<1x128xi1> to vector<32x128xi1>
    %381 = arith.select %380, %377, %378 : vector<32x128xi1>, vector<32x128xf32>
    %c8_i32_112 = arith.constant 8 : i32
    %382 = vector.broadcast %c8_i32_112 : i32 to vector<1x128xi32>
    %383 = arith.andi %41, %382 : vector<1x128xi32>
    %c0_i32_113 = arith.constant 0 : i32
    %384 = vector.broadcast %c0_i32_113 : i32 to vector<1x128xi32>
    %385 = arith.cmpi eq, %383, %384 : vector<1x128xi32>
    %c64_i32_114 = arith.constant 64 : i32
    %386 = vector.broadcast %c64_i32_114 : i32 to vector<1x128xi32>
    %387 = arith.andi %41, %386 : vector<1x128xi32>
    %c0_i32_115 = arith.constant 0 : i32
    %388 = vector.broadcast %c0_i32_115 : i32 to vector<1x128xi32>
    %389 = arith.cmpi eq, %387, %388 : vector<1x128xi32>
    %390 = arith.xori %385, %389 : vector<1x128xi1>
    %cst_116 = arith.constant dense<true> : vector<1x128xi1>
    %391 = arith.xori %390, %cst_116 : vector<1x128xi1>
    %c120_i32_117 = arith.constant 120 : i32
    %392 = tpu.dynamic_rotate %381 by %c120_i32_117 dim 1 : vector<32x128xf32>, i32 -> vector<32x128xf32>
    %c8_i32_118 = arith.constant 8 : i32
    %393 = tpu.dynamic_rotate %381 by %c8_i32_118 dim 1 : vector<32x128xf32>, i32 -> vector<32x128xf32>
    %394 = vector.shape_cast %385 : vector<1x128xi1> to vector<1x128xi1>
    %395 = vector.broadcast %394 : vector<1x128xi1> to vector<32x128xi1>
    %396 = arith.select %395, %392, %393 : vector<32x128xi1>, vector<32x128xf32>
    %397 = arith.minimumf %381, %396 : vector<32x128xf32>
    %398 = arith.maximumf %381, %396 : vector<32x128xf32>
    %399 = vector.shape_cast %391 : vector<1x128xi1> to vector<1x128xi1>
    %400 = vector.broadcast %399 : vector<1x128xi1> to vector<32x128xi1>
    %401 = arith.select %400, %397, %398 : vector<32x128xi1>, vector<32x128xf32>
    %c4_i32_119 = arith.constant 4 : i32
    %402 = vector.broadcast %c4_i32_119 : i32 to vector<1x128xi32>
    %403 = arith.andi %41, %402 : vector<1x128xi32>
    %c0_i32_120 = arith.constant 0 : i32
    %404 = vector.broadcast %c0_i32_120 : i32 to vector<1x128xi32>
    %405 = arith.cmpi eq, %403, %404 : vector<1x128xi32>
    %c64_i32_121 = arith.constant 64 : i32
    %406 = vector.broadcast %c64_i32_121 : i32 to vector<1x128xi32>
    %407 = arith.andi %41, %406 : vector<1x128xi32>
    %c0_i32_122 = arith.constant 0 : i32
    %408 = vector.broadcast %c0_i32_122 : i32 to vector<1x128xi32>
    %409 = arith.cmpi eq, %407, %408 : vector<1x128xi32>
    %410 = arith.xori %405, %409 : vector<1x128xi1>
    %cst_123 = arith.constant dense<true> : vector<1x128xi1>
    %411 = arith.xori %410, %cst_123 : vector<1x128xi1>
    %c124_i32_124 = arith.constant 124 : i32
    %412 = tpu.dynamic_rotate %401 by %c124_i32_124 dim 1 : vector<32x128xf32>, i32 -> vector<32x128xf32>
    %c4_i32_125 = arith.constant 4 : i32
    %413 = tpu.dynamic_rotate %401 by %c4_i32_125 dim 1 : vector<32x128xf32>, i32 -> vector<32x128xf32>
    %414 = vector.shape_cast %405 : vector<1x128xi1> to vector<1x128xi1>
    %415 = vector.broadcast %414 : vector<1x128xi1> to vector<32x128xi1>
    %416 = arith.select %415, %412, %413 : vector<32x128xi1>, vector<32x128xf32>
    %417 = arith.minimumf %401, %416 : vector<32x128xf32>
    %418 = arith.maximumf %401, %416 : vector<32x128xf32>
    %419 = vector.shape_cast %411 : vector<1x128xi1> to vector<1x128xi1>
    %420 = vector.broadcast %419 : vector<1x128xi1> to vector<32x128xi1>
    %421 = arith.select %420, %417, %418 : vector<32x128xi1>, vector<32x128xf32>
    %c2_i32_126 = arith.constant 2 : i32
    %422 = vector.broadcast %c2_i32_126 : i32 to vector<1x128xi32>
    %423 = arith.andi %41, %422 : vector<1x128xi32>
    %c0_i32_127 = arith.constant 0 : i32
    %424 = vector.broadcast %c0_i32_127 : i32 to vector<1x128xi32>
    %425 = arith.cmpi eq, %423, %424 : vector<1x128xi32>
    %c64_i32_128 = arith.constant 64 : i32
    %426 = vector.broadcast %c64_i32_128 : i32 to vector<1x128xi32>
    %427 = arith.andi %41, %426 : vector<1x128xi32>
    %c0_i32_129 = arith.constant 0 : i32
    %428 = vector.broadcast %c0_i32_129 : i32 to vector<1x128xi32>
    %429 = arith.cmpi eq, %427, %428 : vector<1x128xi32>
    %430 = arith.xori %425, %429 : vector<1x128xi1>
    %cst_130 = arith.constant dense<true> : vector<1x128xi1>
    %431 = arith.xori %430, %cst_130 : vector<1x128xi1>
    %c126_i32_131 = arith.constant 126 : i32
    %432 = tpu.dynamic_rotate %421 by %c126_i32_131 dim 1 : vector<32x128xf32>, i32 -> vector<32x128xf32>
    %c2_i32_132 = arith.constant 2 : i32
    %433 = tpu.dynamic_rotate %421 by %c2_i32_132 dim 1 : vector<32x128xf32>, i32 -> vector<32x128xf32>
    %434 = vector.shape_cast %425 : vector<1x128xi1> to vector<1x128xi1>
    %435 = vector.broadcast %434 : vector<1x128xi1> to vector<32x128xi1>
    %436 = arith.select %435, %432, %433 : vector<32x128xi1>, vector<32x128xf32>
    %437 = arith.minimumf %421, %436 : vector<32x128xf32>
    %438 = arith.maximumf %421, %436 : vector<32x128xf32>
    %439 = vector.shape_cast %431 : vector<1x128xi1> to vector<1x128xi1>
    %440 = vector.broadcast %439 : vector<1x128xi1> to vector<32x128xi1>
    %441 = arith.select %440, %437, %438 : vector<32x128xi1>, vector<32x128xf32>
    %c1_i32_133 = arith.constant 1 : i32
    %442 = vector.broadcast %c1_i32_133 : i32 to vector<1x128xi32>
    %443 = arith.andi %41, %442 : vector<1x128xi32>
    %c0_i32_134 = arith.constant 0 : i32
    %444 = vector.broadcast %c0_i32_134 : i32 to vector<1x128xi32>
    %445 = arith.cmpi eq, %443, %444 : vector<1x128xi32>
    %c64_i32_135 = arith.constant 64 : i32
    %446 = vector.broadcast %c64_i32_135 : i32 to vector<1x128xi32>
    %447 = arith.andi %41, %446 : vector<1x128xi32>
    %c0_i32_136 = arith.constant 0 : i32
    %448 = vector.broadcast %c0_i32_136 : i32 to vector<1x128xi32>
    %449 = arith.cmpi eq, %447, %448 : vector<1x128xi32>
    %450 = arith.xori %445, %449 : vector<1x128xi1>
    %cst_137 = arith.constant dense<true> : vector<1x128xi1>
    %451 = arith.xori %450, %cst_137 : vector<1x128xi1>
    %c127_i32_138 = arith.constant 127 : i32
    %452 = tpu.dynamic_rotate %441 by %c127_i32_138 dim 1 : vector<32x128xf32>, i32 -> vector<32x128xf32>
    %c1_i32_139 = arith.constant 1 : i32
    %453 = tpu.dynamic_rotate %441 by %c1_i32_139 dim 1 : vector<32x128xf32>, i32 -> vector<32x128xf32>
    %454 = vector.shape_cast %445 : vector<1x128xi1> to vector<1x128xi1>
    %455 = vector.broadcast %454 : vector<1x128xi1> to vector<32x128xi1>
    %456 = arith.select %455, %452, %453 : vector<32x128xi1>, vector<32x128xf32>
    %457 = arith.minimumf %441, %456 : vector<32x128xf32>
    %458 = arith.maximumf %441, %456 : vector<32x128xf32>
    %459 = vector.shape_cast %451 : vector<1x128xi1> to vector<1x128xi1>
    %460 = vector.broadcast %459 : vector<1x128xi1> to vector<32x128xi1>
    %461 = arith.select %460, %457, %458 : vector<32x128xi1>, vector<32x128xf32>
    %c64_i32_140 = arith.constant 64 : i32
    %462 = vector.broadcast %c64_i32_140 : i32 to vector<1x128xi32>
    %463 = arith.andi %41, %462 : vector<1x128xi32>
    %c0_i32_141 = arith.constant 0 : i32
    %464 = vector.broadcast %c0_i32_141 : i32 to vector<1x128xi32>
    %465 = arith.cmpi eq, %463, %464 : vector<1x128xi32>
    %c128_i32 = arith.constant 128 : i32
    %466 = vector.broadcast %c128_i32 : i32 to vector<1x128xi32>
    %467 = arith.andi %41, %466 : vector<1x128xi32>
    %c0_i32_142 = arith.constant 0 : i32
    %468 = vector.broadcast %c0_i32_142 : i32 to vector<1x128xi32>
    %469 = arith.cmpi eq, %467, %468 : vector<1x128xi32>
    %470 = arith.xori %465, %469 : vector<1x128xi1>
    %cst_143 = arith.constant dense<true> : vector<1x128xi1>
    %471 = arith.xori %470, %cst_143 : vector<1x128xi1>
    %c64_i32_144 = arith.constant 64 : i32
    %472 = tpu.dynamic_rotate %461 by %c64_i32_144 dim 1 : vector<32x128xf32>, i32 -> vector<32x128xf32>
    %c64_i32_145 = arith.constant 64 : i32
    %473 = tpu.dynamic_rotate %461 by %c64_i32_145 dim 1 : vector<32x128xf32>, i32 -> vector<32x128xf32>
    %474 = vector.shape_cast %465 : vector<1x128xi1> to vector<1x128xi1>
    %475 = vector.broadcast %474 : vector<1x128xi1> to vector<32x128xi1>
    %476 = arith.select %475, %472, %473 : vector<32x128xi1>, vector<32x128xf32>
    %477 = arith.minimumf %461, %476 : vector<32x128xf32>
    %478 = arith.maximumf %461, %476 : vector<32x128xf32>
    %479 = vector.shape_cast %471 : vector<1x128xi1> to vector<1x128xi1>
    %480 = vector.broadcast %479 : vector<1x128xi1> to vector<32x128xi1>
    %481 = arith.select %480, %477, %478 : vector<32x128xi1>, vector<32x128xf32>
    %c32_i32_146 = arith.constant 32 : i32
    %482 = vector.broadcast %c32_i32_146 : i32 to vector<1x128xi32>
    %483 = arith.andi %41, %482 : vector<1x128xi32>
    %c0_i32_147 = arith.constant 0 : i32
    %484 = vector.broadcast %c0_i32_147 : i32 to vector<1x128xi32>
    %485 = arith.cmpi eq, %483, %484 : vector<1x128xi32>
    %c128_i32_148 = arith.constant 128 : i32
    %486 = vector.broadcast %c128_i32_148 : i32 to vector<1x128xi32>
    %487 = arith.andi %41, %486 : vector<1x128xi32>
    %c0_i32_149 = arith.constant 0 : i32
    %488 = vector.broadcast %c0_i32_149 : i32 to vector<1x128xi32>
    %489 = arith.cmpi eq, %487, %488 : vector<1x128xi32>
    %490 = arith.xori %485, %489 : vector<1x128xi1>
    %cst_150 = arith.constant dense<true> : vector<1x128xi1>
    %491 = arith.xori %490, %cst_150 : vector<1x128xi1>
    %c96_i32_151 = arith.constant 96 : i32
    %492 = tpu.dynamic_rotate %481 by %c96_i32_151 dim 1 : vector<32x128xf32>, i32 -> vector<32x128xf32>
    %c32_i32_152 = arith.constant 32 : i32
    %493 = tpu.dynamic_rotate %481 by %c32_i32_152 dim 1 : vector<32x128xf32>, i32 -> vector<32x128xf32>
    %494 = vector.shape_cast %485 : vector<1x128xi1> to vector<1x128xi1>
    %495 = vector.broadcast %494 : vector<1x128xi1> to vector<32x128xi1>
    %496 = arith.select %495, %492, %493 : vector<32x128xi1>, vector<32x128xf32>
    %497 = arith.minimumf %481, %496 : vector<32x128xf32>
    %498 = arith.maximumf %481, %496 : vector<32x128xf32>
    %499 = vector.shape_cast %491 : vector<1x128xi1> to vector<1x128xi1>
    %500 = vector.broadcast %499 : vector<1x128xi1> to vector<32x128xi1>
    %501 = arith.select %500, %497, %498 : vector<32x128xi1>, vector<32x128xf32>
    %c16_i32_153 = arith.constant 16 : i32
    %502 = vector.broadcast %c16_i32_153 : i32 to vector<1x128xi32>
    %503 = arith.andi %41, %502 : vector<1x128xi32>
    %c0_i32_154 = arith.constant 0 : i32
    %504 = vector.broadcast %c0_i32_154 : i32 to vector<1x128xi32>
    %505 = arith.cmpi eq, %503, %504 : vector<1x128xi32>
    %c128_i32_155 = arith.constant 128 : i32
    %506 = vector.broadcast %c128_i32_155 : i32 to vector<1x128xi32>
    %507 = arith.andi %41, %506 : vector<1x128xi32>
    %c0_i32_156 = arith.constant 0 : i32
    %508 = vector.broadcast %c0_i32_156 : i32 to vector<1x128xi32>
    %509 = arith.cmpi eq, %507, %508 : vector<1x128xi32>
    %510 = arith.xori %505, %509 : vector<1x128xi1>
    %cst_157 = arith.constant dense<true> : vector<1x128xi1>
    %511 = arith.xori %510, %cst_157 : vector<1x128xi1>
    %c112_i32_158 = arith.constant 112 : i32
    %512 = tpu.dynamic_rotate %501 by %c112_i32_158 dim 1 : vector<32x128xf32>, i32 -> vector<32x128xf32>
    %c16_i32_159 = arith.constant 16 : i32
    %513 = tpu.dynamic_rotate %501 by %c16_i32_159 dim 1 : vector<32x128xf32>, i32 -> vector<32x128xf32>
    %514 = vector.shape_cast %505 : vector<1x128xi1> to vector<1x128xi1>
    %515 = vector.broadcast %514 : vector<1x128xi1> to vector<32x128xi1>
    %516 = arith.select %515, %512, %513 : vector<32x128xi1>, vector<32x128xf32>
    %517 = arith.minimumf %501, %516 : vector<32x128xf32>
    %518 = arith.maximumf %501, %516 : vector<32x128xf32>
    %519 = vector.shape_cast %511 : vector<1x128xi1> to vector<1x128xi1>
    %520 = vector.broadcast %519 : vector<1x128xi1> to vector<32x128xi1>
    %521 = arith.select %520, %517, %518 : vector<32x128xi1>, vector<32x128xf32>
    %c8_i32_160 = arith.constant 8 : i32
    %522 = vector.broadcast %c8_i32_160 : i32 to vector<1x128xi32>
    %523 = arith.andi %41, %522 : vector<1x128xi32>
    %c0_i32_161 = arith.constant 0 : i32
    %524 = vector.broadcast %c0_i32_161 : i32 to vector<1x128xi32>
    %525 = arith.cmpi eq, %523, %524 : vector<1x128xi32>
    %c128_i32_162 = arith.constant 128 : i32
    %526 = vector.broadcast %c128_i32_162 : i32 to vector<1x128xi32>
    %527 = arith.andi %41, %526 : vector<1x128xi32>
    %c0_i32_163 = arith.constant 0 : i32
    %528 = vector.broadcast %c0_i32_163 : i32 to vector<1x128xi32>
    %529 = arith.cmpi eq, %527, %528 : vector<1x128xi32>
    %530 = arith.xori %525, %529 : vector<1x128xi1>
    %cst_164 = arith.constant dense<true> : vector<1x128xi1>
    %531 = arith.xori %530, %cst_164 : vector<1x128xi1>
    %c120_i32_165 = arith.constant 120 : i32
    %532 = tpu.dynamic_rotate %521 by %c120_i32_165 dim 1 : vector<32x128xf32>, i32 -> vector<32x128xf32>
    %c8_i32_166 = arith.constant 8 : i32
    %533 = tpu.dynamic_rotate %521 by %c8_i32_166 dim 1 : vector<32x128xf32>, i32 -> vector<32x128xf32>
    %534 = vector.shape_cast %525 : vector<1x128xi1> to vector<1x128xi1>
    %535 = vector.broadcast %534 : vector<1x128xi1> to vector<32x128xi1>
    %536 = arith.select %535, %532, %533 : vector<32x128xi1>, vector<32x128xf32>
    %537 = arith.minimumf %521, %536 : vector<32x128xf32>
    %538 = arith.maximumf %521, %536 : vector<32x128xf32>
    %539 = vector.shape_cast %531 : vector<1x128xi1> to vector<1x128xi1>
    %540 = vector.broadcast %539 : vector<1x128xi1> to vector<32x128xi1>
    %541 = arith.select %540, %537, %538 : vector<32x128xi1>, vector<32x128xf32>
    %c4_i32_167 = arith.constant 4 : i32
    %542 = vector.broadcast %c4_i32_167 : i32 to vector<1x128xi32>
    %543 = arith.andi %41, %542 : vector<1x128xi32>
    %c0_i32_168 = arith.constant 0 : i32
    %544 = vector.broadcast %c0_i32_168 : i32 to vector<1x128xi32>
    %545 = arith.cmpi eq, %543, %544 : vector<1x128xi32>
    %c128_i32_169 = arith.constant 128 : i32
    %546 = vector.broadcast %c128_i32_169 : i32 to vector<1x128xi32>
    %547 = arith.andi %41, %546 : vector<1x128xi32>
    %c0_i32_170 = arith.constant 0 : i32
    %548 = vector.broadcast %c0_i32_170 : i32 to vector<1x128xi32>
    %549 = arith.cmpi eq, %547, %548 : vector<1x128xi32>
    %550 = arith.xori %545, %549 : vector<1x128xi1>
    %cst_171 = arith.constant dense<true> : vector<1x128xi1>
    %551 = arith.xori %550, %cst_171 : vector<1x128xi1>
    %c124_i32_172 = arith.constant 124 : i32
    %552 = tpu.dynamic_rotate %541 by %c124_i32_172 dim 1 : vector<32x128xf32>, i32 -> vector<32x128xf32>
    %c4_i32_173 = arith.constant 4 : i32
    %553 = tpu.dynamic_rotate %541 by %c4_i32_173 dim 1 : vector<32x128xf32>, i32 -> vector<32x128xf32>
    %554 = vector.shape_cast %545 : vector<1x128xi1> to vector<1x128xi1>
    %555 = vector.broadcast %554 : vector<1x128xi1> to vector<32x128xi1>
    %556 = arith.select %555, %552, %553 : vector<32x128xi1>, vector<32x128xf32>
    %557 = arith.minimumf %541, %556 : vector<32x128xf32>
    %558 = arith.maximumf %541, %556 : vector<32x128xf32>
    %559 = vector.shape_cast %551 : vector<1x128xi1> to vector<1x128xi1>
    %560 = vector.broadcast %559 : vector<1x128xi1> to vector<32x128xi1>
    %561 = arith.select %560, %557, %558 : vector<32x128xi1>, vector<32x128xf32>
    %c2_i32_174 = arith.constant 2 : i32
    %562 = vector.broadcast %c2_i32_174 : i32 to vector<1x128xi32>
    %563 = arith.andi %41, %562 : vector<1x128xi32>
    %c0_i32_175 = arith.constant 0 : i32
    %564 = vector.broadcast %c0_i32_175 : i32 to vector<1x128xi32>
    %565 = arith.cmpi eq, %563, %564 : vector<1x128xi32>
    %c128_i32_176 = arith.constant 128 : i32
    %566 = vector.broadcast %c128_i32_176 : i32 to vector<1x128xi32>
    %567 = arith.andi %41, %566 : vector<1x128xi32>
    %c0_i32_177 = arith.constant 0 : i32
    %568 = vector.broadcast %c0_i32_177 : i32 to vector<1x128xi32>
    %569 = arith.cmpi eq, %567, %568 : vector<1x128xi32>
    %570 = arith.xori %565, %569 : vector<1x128xi1>
    %cst_178 = arith.constant dense<true> : vector<1x128xi1>
    %571 = arith.xori %570, %cst_178 : vector<1x128xi1>
    %c126_i32_179 = arith.constant 126 : i32
    %572 = tpu.dynamic_rotate %561 by %c126_i32_179 dim 1 : vector<32x128xf32>, i32 -> vector<32x128xf32>
    %c2_i32_180 = arith.constant 2 : i32
    %573 = tpu.dynamic_rotate %561 by %c2_i32_180 dim 1 : vector<32x128xf32>, i32 -> vector<32x128xf32>
    %574 = vector.shape_cast %565 : vector<1x128xi1> to vector<1x128xi1>
    %575 = vector.broadcast %574 : vector<1x128xi1> to vector<32x128xi1>
    %576 = arith.select %575, %572, %573 : vector<32x128xi1>, vector<32x128xf32>
    %577 = arith.minimumf %561, %576 : vector<32x128xf32>
    %578 = arith.maximumf %561, %576 : vector<32x128xf32>
    %579 = vector.shape_cast %571 : vector<1x128xi1> to vector<1x128xi1>
    %580 = vector.broadcast %579 : vector<1x128xi1> to vector<32x128xi1>
    %581 = arith.select %580, %577, %578 : vector<32x128xi1>, vector<32x128xf32>
    %c1_i32_181 = arith.constant 1 : i32
    %582 = vector.broadcast %c1_i32_181 : i32 to vector<1x128xi32>
    %583 = arith.andi %41, %582 : vector<1x128xi32>
    %c0_i32_182 = arith.constant 0 : i32
    %584 = vector.broadcast %c0_i32_182 : i32 to vector<1x128xi32>
    %585 = arith.cmpi eq, %583, %584 : vector<1x128xi32>
    %c128_i32_183 = arith.constant 128 : i32
    %586 = vector.broadcast %c128_i32_183 : i32 to vector<1x128xi32>
    %587 = arith.andi %41, %586 : vector<1x128xi32>
    %c0_i32_184 = arith.constant 0 : i32
    %588 = vector.broadcast %c0_i32_184 : i32 to vector<1x128xi32>
    %589 = arith.cmpi eq, %587, %588 : vector<1x128xi32>
    %590 = arith.xori %585, %589 : vector<1x128xi1>
    %cst_185 = arith.constant dense<true> : vector<1x128xi1>
    %591 = arith.xori %590, %cst_185 : vector<1x128xi1>
    %c127_i32_186 = arith.constant 127 : i32
    %592 = tpu.dynamic_rotate %581 by %c127_i32_186 dim 1 : vector<32x128xf32>, i32 -> vector<32x128xf32>
    %c1_i32_187 = arith.constant 1 : i32
    %593 = tpu.dynamic_rotate %581 by %c1_i32_187 dim 1 : vector<32x128xf32>, i32 -> vector<32x128xf32>
    %594 = vector.shape_cast %585 : vector<1x128xi1> to vector<1x128xi1>
    %595 = vector.broadcast %594 : vector<1x128xi1> to vector<32x128xi1>
    %596 = arith.select %595, %592, %593 : vector<32x128xi1>, vector<32x128xf32>
    %597 = arith.minimumf %581, %596 : vector<32x128xf32>
    %598 = arith.maximumf %581, %596 : vector<32x128xf32>
    %599 = vector.shape_cast %591 : vector<1x128xi1> to vector<1x128xi1>
    %600 = vector.broadcast %599 : vector<1x128xi1> to vector<32x128xi1>
    %601 = arith.select %600, %597, %598 : vector<32x128xi1>, vector<32x128xf32>
    %602 = vector.extract_strided_slice %601 {offsets = [0, 0], sizes = [16, 128], strides = [1, 1]} : vector<32x128xf32> to vector<16x128xf32>
    %603 = vector.extract_strided_slice %601 {offsets = [16, 0], sizes = [16, 128], strides = [1, 1]} : vector<32x128xf32> to vector<16x128xf32>
    %604 = arith.subf %602, %603 : vector<16x128xf32>
    %605 = arith.mulf %604, %604 : vector<16x128xf32>
    %cst_188 = arith.constant dense<0.000000e+00> : vector<16xf32>
    %606 = vector.multi_reduction <add>, %605, %cst_188 [1] : vector<16x128xf32> to vector<16xf32>
    %607 = vector.shape_cast %606 : vector<16xf32> to vector<16x1xf32>
    %cst_189 = arith.constant dense<0.000000e+00> : vector<1xf32>
    %608 = vector.multi_reduction <add>, %607, %cst_189 [0] : vector<16x1xf32> to vector<1xf32>
    %609 = vector.shape_cast %608 : vector<1xf32> to vector<1x1xf32>
    %cst_190 = arith.constant 4.8828125E-4 : f32
    %610 = vector.broadcast %cst_190 : f32 to vector<1x1xf32>
    %611 = arith.mulf %609, %610 : vector<1x1xf32>
    %c0_191 = arith.constant 0 : index
    %c0_192 = arith.constant 0 : index
    %c0_193 = arith.constant 0 : index
    %c0_194 = arith.constant 0 : index
    %612 = vector.load %arg5[%c0_191, %c0_192, %c0_193, %c0_194] : memref<1x1x1x1xf32, #tpu.memory_space<vmem>>, vector<1x1x1x1xf32>
    %613 = vector.shape_cast %612 : vector<1x1x1x1xf32> to vector<1x1xf32>
    %614 = vector.shape_cast %611 : vector<1x1xf32> to vector<1x1x1x1xf32>
    tpu.vector_store %arg5[%c0_191, %c0_192, %c0_193, %c0_194], %614 {strides = array<i32>} : memref<1x1x1x1xf32, #tpu.memory_space<vmem>>, vector<1x1x1x1xf32>,
    return
  }
  func.func @transform_0(%arg0: i32, %arg1: i32) -> (i32, i32, i32) {
    %c0_i32 = arith.constant 0 : i32
    %c0_i32_0 = arith.constant 0 : i32
    %c0_i32_1 = arith.constant 0 : i32
    return %arg0, %c0_i32, %c0_i32_0 : i32, i32, i32
  }
  func.func @transform_1(%arg0: i32, %arg1: i32) -> (i32, i32, i32) {
    %c0_i32 = arith.constant 0 : i32
    %c0_i32_0 = arith.constant 0 : i32
    %c0_i32_1 = arith.constant 0 : i32
    return %arg0, %c0_i32, %c0_i32_0 : i32, i32, i32
  }
  func.func @transform_2(%arg0: i32, %arg1: i32) -> (i32, i32, i32) {
    %c0_i32 = arith.constant 0 : i32
    %c0_i32_0 = arith.constant 0 : i32
    return %arg0, %arg1, %c0_i32 : i32, i32, i32
  }
  func.func @transform_3(%arg0: i32, %arg1: i32) -> (i32, i32, i32, i32) {
    %c0_i32 = arith.constant 0 : i32
    %c0_i32_0 = arith.constant 0 : i32
    %c0_i32_1 = arith.constant 0 : i32
    return %arg0, %arg1, %c0_i32, %c0_i32_0 : i32, i32, i32, i32
  }
}

</mosaic_0001>

<llo_original>
// kernel: tpu_custom_call.1
$region0: #{tpu_custom_call.1}
  #allocation0 [shape = 'u32[]', space=smem, size = 0x4, offset = 0x4, fixed_abs, tag = 'smem constant byte address 0x4 - core index']
  #allocation1 [shape = 'u32[144,128]{1,0:T(1,128)}', space=vmem, size = 0x12000, scoped, tag = 'internal scratch']
  %s0 = inlined_call_operand.vmem [shape: f32[2,3,128], index: 0, kind: input, shape index: {}]
  %s1 = inlined_call_operand.vmem [shape: f32[2,3,128], index: 1, kind: input, shape index: {}]
  %s2 = inlined_call_operand.vmem [shape: f32[2,16,3], index: 2, kind: input, shape index: {}]
  %s3 = inlined_call_operand.vmem [shape: f32[2,1,1,1], index: 3, kind: output, shape index: {}]
  %s4 = sld [smem:[#allocation0]]
  $region45: #{tpu_custom_call.1} parent=0
    _
  %s6 = ssub.s32 1, %s4
  %s7 = scalar_select 0, %s6, %s4
  loop: start=0, step=1, limit=4
  $region2: #{tpu_custom_call.1} parent=0 // loop_pre_header
    _
  $region3: #{tpu_custom_call.1} parent=0 // loop_header
    %s9 = sphi 0, %s13
    %p10 = scmp.ge.s32.totalorder %s9, 4
    %s16 = sphi 0, %s28
    %s17 = sphi 0, %s24
    %s18 = sphi 0, %s16
    %s19 = sphi 0, %s17
    %s20 = sphi 0, %s18
    %s21 = sphi 0, %s19
    %s31 = sphi 0, %s33
    %s34 = sphi 0, %s31
    %s35 = sphi 0, %s34
    %s51 = sphi 0, %s35
    %s57 = sphi 0, %s59
    %s60 = sphi 0, %s57
    %s61 = sphi 0, %s60
    %s77 = sphi 0, %s61
    %s85 = sphi 0, %s87
    %s88 = sphi 0, %s85
    %s89 = sphi 0, %s88
    %s105 = sphi 0, %s89
    %s113 = sphi 0, %s115
    %s116 = sphi 0, %s113
    %s117 = sphi 0, %s116
    %s133 = sphi 0, %s117
  $region4: #{tpu_custom_call.1} parent=0 // loop_header_branch
    %12 = sbr.rel (%p10) target = $region8
  $region5: #{tpu_custom_call.1} parent=0 // loop_body
    %s14 = ssub.s32 %s9, 1
    %s15 = ssub.s32 %s9, 2
    %s22 = sadd.s32 1, %s17
    %p23 = scmp.ge.s32.totalorder %s22, 1
    %s24 = scalar_select %p23, 0, %s22
    %s25 = sadd.s32 1, %s16
    %s26 = scalar_select %p23, %s25, %s16
    %p27 = scmp.ge.s32.totalorder %s26, 2
    %s28 = scalar_select %p27, 0, %s26
    %s29 = ssub.s32 %s16, %s28
    %p30 = scmp.eq.s32.totalorder %s29, 0
    %s32 = sadd.s32 %s31, 1
    %s33 = scalar_select %p30, %s31, %s32
    %p36 = pneg %p30
    %p37 = scmp.eq.s32.totalorder %s9, 1
    %p38 = por %p36, %p37
    %p39 = scmp.ne.s32.totalorder %s31, %s34
    %p40 = scmp.eq.s32.totalorder %s9, 0
    %p41 = por %p39, %p40
    %p42 = scmp.ne.s32.totalorder %s31, %s34
    %p43 = scmp.eq.s32.totalorder %s14, 1
    %p44 = por %p42, %p43
    %p45 = scmp.ne.s32.totalorder %s34, %s35
    %p46 = scmp.eq.s32.totalorder %s14, 0
    %p47 = por %p45, %p46
    %p48 = scmp.ne.s32.totalorder %s34, %s35
    %p49 = scmp.eq.s32.totalorder %s15, 1
    %p50 = por %p48, %p49
    %p52 = scmp.ne.s32.totalorder %s35, %s51
    %p53 = scmp.eq.s32.totalorder %s15, 0
    %p54 = por %p52, %p53
    %s55 = ssub.s32 %s16, %s28
    %p56 = scmp.eq.s32.totalorder %s55, 0
    %s58 = sadd.s32 %s57, 1
    %s59 = scalar_select %p56, %s57, %s58
    %p62 = pneg %p56
    %p63 = scmp.eq.s32.totalorder %s9, 1
    %p64 = por %p62, %p63
    %p65 = scmp.ne.s32.totalorder %s57, %s60
    %p66 = scmp.eq.s32.totalorder %s9, 0
    %p67 = por %p65, %p66
    %p68 = scmp.ne.s32.totalorder %s57, %s60
    %p69 = scmp.eq.s32.totalorder %s14, 1
    %p70 = por %p68, %p69
    %p71 = scmp.ne.s32.totalorder %s60, %s61
    %p72 = scmp.eq.s32.totalorder %s14, 0
    %p73 = por %p71, %p72
    %p74 = scmp.ne.s32.totalorder %s60, %s61
    %p75 = scmp.eq.s32.totalorder %s15, 1
    %p76 = por %p74, %p75
    %p78 = scmp.ne.s32.totalorder %s61, %s77
    %p79 = scmp.eq.s32.totalorder %s15, 0
    %p80 = por %p78, %p79
    %s81 = ssub.s32 %s16, %s28
    %s82 = ssub.s32 %s17, %s24
    %s83 = sor.u32 %s81, %s82
    %p84 = scmp.eq.s32.totalorder %s83, 0
    %s86 = sadd.s32 %s85, 1
    %s87 = scalar_select %p84, %s85, %s86
    %p90 = pneg %p84
    %p91 = scmp.eq.s32.totalorder %s9, 1
    %p92 = por %p90, %p91
    %p93 = scmp.ne.s32.totalorder %s85, %s88
    %p94 = scmp.eq.s32.totalorder %s9, 0
    %p95 = por %p93, %p94
    %p96 = scmp.ne.s32.totalorder %s85, %s88
    %p97 = scmp.eq.s32.totalorder %s14, 1
    %p98 = por %p96, %p97
    %p99 = scmp.ne.s32.totalorder %s88, %s89
    %p100 = scmp.eq.s32.totalorder %s14, 0
    %p101 = por %p99, %p100
    %p102 = scmp.ne.s32.totalorder %s88, %s89
    %p103 = scmp.eq.s32.totalorder %s15, 1
    %p104 = por %p102, %p103
    %p106 = scmp.ne.s32.totalorder %s89, %s105
    %p107 = scmp.eq.s32.totalorder %s15, 0
    %p108 = por %p106, %p107
    %s109 = ssub.s32 %s16, %s28
    %s110 = ssub.s32 %s17, %s24
    %s111 = sor.u32 %s109, %s110
    %p112 = scmp.eq.s32.totalorder %s111, 0
    %s114 = sadd.s32 %s113, 1
    %s115 = scalar_select %p112, %s113, %s114
    %p118 = pneg %p112
    %p119 = scmp.eq.s32.totalorder %s9, 1
    %p120 = por %p118, %p119
    %p121 = scmp.ne.s32.totalorder %s113, %s116
    %p122 = scmp.eq.s32.totalorder %s9, 0
    %p123 = por %p121, %p122
    %p124 = scmp.ne.s32.totalorder %s113, %s116
    %p125 = scmp.eq.s32.totalorder %s14, 1
    %p126 = por %p124, %p125
    %p127 = scmp.ne.s32.totalorder %s116, %s117
    %p128 = scmp.eq.s32.totalorder %s14, 0
    %p129 = por %p127, %p128
    %p130 = scmp.ne.s32.totalorder %s116, %s117
    %p131 = scmp.eq.s32.totalorder %s15, 1
    %p132 = por %p130, %p131
    %p134 = scmp.ne.s32.totalorder %s117, %s133
    %p135 = scmp.eq.s32.totalorder %s15, 0
    %p136 = por %p134, %p135
    %p137 = scmp.le.s32.totalorder 1, %s9
    %p138 = scmp.lt.s32.totalorder %s9, 3
    %p139 = pnand %p137, %p138
    %p140 = pneg %p139
    // Predicated region
    $region9: #{tpu_custom_call.1} parent=5 // pred_check
      _
    $region10: #{tpu_custom_call.1} parent=5 // pred_check_branch
      %142 = sbr.rel (%p139) target = $region12
    $region11: #{tpu_custom_call.1} parent=5 // pred_region
      %s143 = ssub.s32 %s9, 1
    $region12: #{tpu_custom_call.1} parent=5 // pred_fallthru
      _
    %p144 = scmp.lt.s32.totalorder %s9, 2
    // Predicated region
    $region13: #{tpu_custom_call.1} parent=5 // pred_check
      %p145 = pneg %p144
    $region14: #{tpu_custom_call.1} parent=5 // pred_check_branch
      %147 = sbr.rel (%p145) target = $region16
    $region15: #{tpu_custom_call.1} parent=5 // pred_region
      // Predicated region
      $region17: #{tpu_custom_call.1} parent=15 // pred_check
        %p148 = pneg %p41
      $region18: #{tpu_custom_call.1} parent=15 // pred_check_branch
        %150 = sbr.rel (%p148) target = $region20
      $region19: #{tpu_custom_call.1} parent=15 // pred_region
        %p151 = scmp.lt.s32.totalorder %s16, 1
        %s152 = scalar_select %p151, %s16, 1
        %s153 = smul.addr %s152, 4
        %s154 = scalar_lea.vmem %s0, %s153
      $region20: #{tpu_custom_call.1} parent=15 // pred_fallthru
        _
      // Predicated region
      $region21: #{tpu_custom_call.1} parent=15 // pred_check
        %p155 = pneg %p67
      $region22: #{tpu_custom_call.1} parent=15 // pred_check_branch
        %157 = sbr.rel (%p155) target = $region24
      $region23: #{tpu_custom_call.1} parent=15 // pred_region
        %p158 = scmp.lt.s32.totalorder %s16, 1
        %s159 = scalar_select %p158, %s16, 1
        %s160 = smul.addr %s159, 4
        %s161 = scalar_lea.vmem %s1, %s160
      $region24: #{tpu_custom_call.1} parent=15 // pred_fallthru
        _
      // Predicated region
      $region25: #{tpu_custom_call.1} parent=15 // pred_check
        %p162 = pneg %p95
      $region26: #{tpu_custom_call.1} parent=15 // pred_check_branch
        %164 = sbr.rel (%p162) target = $region28
      $region27: #{tpu_custom_call.1} parent=15 // pred_region
        %s165 = smul.u32 2, %s17
        %p166 = scmp.lt.s32.totalorder %s16, 1
        %s167 = scalar_select %p166, %s16, 1
        %p168 = scmp.lt.s32.totalorder %s165, 1
        %s169 = scalar_select %p168, %s165, 1
        %s170 = smul.addr %s167, 2
        %s171 = sadd.s32 %s169, %s170
        %s172 = smul.addr %s171, 8
        %s173 = scalar_lea.vmem %s2, %s172
        %s174 = smul.u32 2, %s17
      $region28: #{tpu_custom_call.1} parent=15 // pred_fallthru
        _
    $region16: #{tpu_custom_call.1} parent=5 // pred_fallthru
      _
    %p175 = scmp.le.s32.totalorder 1, %s9
    %p176 = scmp.lt.s32.totalorder %s9, 3
    %p177 = pnand %p175, %p176
    %p178 = pneg %p177
    // Predicated region
    $region29: #{tpu_custom_call.1} parent=5 // pred_check
      _
    $region30: #{tpu_custom_call.1} parent=5 // pred_check_branch
      %180 = sbr.rel (%p177) target = $region32
    $region31: #{tpu_custom_call.1} parent=5 // pred_region
      %s181 = ssub.s32 %s9, 1
      %p182 = scmp.lt.s32.totalorder %s18, 1
      %s183 = scalar_select %p182, %s18, 1
      %s184 = smul.addr %s183, 4
      %s185 = scalar_lea.vmem %s0, %s184
      %p186 = pneg %p47
      %p187 = pneg %p44
      %p188 = scmp.lt.s32.totalorder %s18, 1
      %s189 = scalar_select %p188, %s18, 1
      %s190 = smul.addr %s189, 4
      %s191 = scalar_lea.vmem %s1, %s190
      %p192 = pneg %p73
      %p193 = pneg %p70
      %s194 = smul.u32 2, %s19
      %p195 = scmp.lt.s32.totalorder %s18, 1
      %s196 = scalar_select %p195, %s18, 1
      %p197 = scmp.lt.s32.totalorder %s194, 1
      %s198 = scalar_select %p197, %s194, 1
      %s199 = smul.addr %s196, 2
      %s200 = sadd.s32 %s198, %s199
      %s201 = smul.addr %s200, 8
      %s202 = scalar_lea.vmem %s2, %s201
      %p203 = pneg %p101
      %p204 = pneg %p98
      %p205 = pneg %p129
      %p206 = pneg %p126
      %p207 = scmp.lt.s32.totalorder %s18, 1
      %s208 = scalar_select %p207, %s18, 1
      %p209 = scmp.lt.s32.totalorder %s19, 0
      %s210 = scalar_select %p209, %s19, 0
      %s211 = sadd.s32 %s210, %s208
      %s212 = scalar_lea.vmem %s3, %s211
      %p213 = scmp.lt.s32.totalorder %s18, 1
      %s214 = scalar_select %p213, %s18, 1
      %s215 = smul.addr %s214, 4
      %s216 = scalar_lea.vmem %s0, %s215
      %p217 = scmp.lt.s32.totalorder %s18, 1
      %s218 = scalar_select %p217, %s18, 1
      %s219 = smul.addr %s218, 4
      %s220 = scalar_lea.vmem %s1, %s219
      %s221 = smul.u32 2, %s19
      %p222 = scmp.lt.s32.totalorder %s18, 1
      %s223 = scalar_select %p222, %s18, 1
      %p224 = scmp.lt.s32.totalorder %s221, 1
      %s225 = scalar_select %p224, %s221, 1
      %s226 = smul.addr %s223, 2
      %s227 = sadd.s32 %s225, %s226
      %s228 = smul.addr %s227, 8
      %s229 = scalar_lea.vmem %s2, %s228
      %s230 = smul.u32 2, %s19
      %p231 = scmp.lt.s32.totalorder %s18, 1
      %s232 = scalar_select %p231, %s18, 1
      %p233 = scmp.lt.s32.totalorder %s19, 0
      %s234 = scalar_select %p233, %s19, 0
      %s235 = sadd.s32 %s234, %s232
      %s236 = scalar_lea.vmem %s3, %s235
      %v237 = vld [vmem:[%s216] sm:$0x7]
      %v238 = vld [vmem:[%s220] sm:$0x7]
      %v239 = vld [vmem:[%s229] sm:$0xff]
      %v240 = vld [vmem:[%s229 + $0x8] sm:$0xff]
      %242 = vset.pattern.permute.xlu0 0
      %243 = vperm.xlu0 %242, %v239
      %v244 = vpop.permute.xlu0 %243
      %247 = vset.pattern.permute.xlu0 0
      %248 = vperm.xlu0 %247, %v240
      %v249 = vpop.permute.xlu0 %248
      %v251 = vlaneseq
      %v252 = vshrl.u32 %v251, 7
      %v253 = vsub.s32 0, %v252
      %v254 = vrot.slane %v237, %v253
      %v255 = vmul.f32 %v244, %v254
      %v256 = vmul.f32 %v249, %v254
      %257 = vset.pattern.permute.xlu0 1
      %258 = vperm.xlu0 %257, %v239
      %v259 = vpop.permute.xlu0 %258
      %261 = vset.pattern.permute.xlu0 1
      %262 = vperm.xlu0 %261, %v240
      %v263 = vpop.permute.xlu0 %262
      %v265 = vlaneseq
      %v266 = vshrl.u32 %v265, 7
      %v267 = vsub.s32 1, %v266
      %v268 = vrot.slane %v237, %v267
      %v269 = vmul.f32 %v259, %v268
      %v270 = vmul.f32 %v263, %v268
      %v271 = vadd.f32 %v255, %v269
      %v272 = vadd.f32 %v256, %v270
      %273 = vset.pattern.permute.xlu0 2
      %274 = vperm.xlu0 %273, %v239
      %v275 = vpop.permute.xlu0 %274
      %277 = vset.pattern.permute.xlu0 2
      %278 = vperm.xlu0 %277, %v240
      %v279 = vpop.permute.xlu0 %278
      %v281 = vlaneseq
      %v282 = vshrl.u32 %v281, 7
      %v283 = vsub.s32 2, %v282
      %v284 = vrot.slane %v237, %v283
      %v285 = vmul.f32 %v275, %v284
      %v286 = vmul.f32 %v279, %v284
      %v287 = vadd.f32 %v271, %v285
      %v288 = vadd.f32 %v272, %v286
      %v289 = vlaneseq
      %v290 = vshrl.u32 %v289, 7
      %v291 = vsub.s32 0, %v290
      %v292 = vrot.slane %v238, %v291
      %v293 = vmul.f32 %v244, %v292
      %v294 = vmul.f32 %v249, %v292
      %v295 = vlaneseq
      %v296 = vshrl.u32 %v295, 7
      %v297 = vsub.s32 1, %v296
      %v298 = vrot.slane %v238, %v297
      %v299 = vmul.f32 %v259, %v298
      %v300 = vmul.f32 %v263, %v298
      %v301 = vadd.f32 %v293, %v299
      %v302 = vadd.f32 %v294, %v300
      %v303 = vlaneseq
      %v304 = vshrl.u32 %v303, 7
      %v305 = vsub.s32 2, %v304
      %v306 = vrot.slane %v238, %v305
      %v307 = vmul.f32 %v275, %v306
      %v308 = vmul.f32 %v279, %v306
      %v309 = vadd.f32 %v301, %v307
      %v310 = vadd.f32 %v302, %v308
      %v311 = vlaneseq
      %v312 = vand.u32 %v311, 127
      %v313 = vand.u32 %v312, 1
      %vm314 = vcmp.eq.s32.totalorder %v313, 0
      %v315 = vand.u32 %v312, 2
      %vm316 = vcmp.eq.s32.totalorder %v315, 0
      %vm317 = vmxor %vm314, %vm316
      %vm318 = vmxor %vm317, 1
      %319 = vrot.lane.b32.xlu0 %v287, 127
      %v320 = vpop.permute.xlu0 %319
      %321 = vrot.lane.b32.xlu0 %v288, 127
      %v322 = vpop.permute.xlu0 %321
      %323 = vrot.lane.b32.xlu0 %v309, 127
      %v324 = vpop.permute.xlu0 %323
      %325 = vrot.lane.b32.xlu0 %v310, 127
      %v326 = vpop.permute.xlu0 %325
      %327 = vrot.lane.b32.xlu0 %v287, 1
      %v328 = vpop.permute.xlu0 %327
      %329 = vrot.lane.b32.xlu0 %v288, 1
      %v330 = vpop.permute.xlu0 %329
      %331 = vrot.lane.b32.xlu0 %v309, 1
      %v332 = vpop.permute.xlu0 %331
      %333 = vrot.lane.b32.xlu0 %v310, 1
      %v334 = vpop.permute.xlu0 %333
      %v335 = vsel %vm314, 1, 0
      %vm336 = vcmp.eq.s32.totalorder %v335, 1
      %v337 = vsel %vm336, %v320, %v328
      %v338 = vsel %vm336, %v322, %v330
      %v339 = vsel %vm336, %v324, %v332
      %v340 = vsel %vm336, %v326, %v334
      %v341 = vmin.f32 %v287, %v337
      %v342 = vmin.f32 %v288, %v338
      %v343 = vmin.f32 %v309, %v339
      %v344 = vmin.f32 %v310, %v340
      %v345 = vmax.f32 %v287, %v337
      %v346 = vmax.f32 %v288, %v338
      %v347 = vmax.f32 %v309, %v339
      %v348 = vmax.f32 %v310, %v340
      %v349 = vsel %vm318, 1, 0
      %vm350 = vcmp.eq.s32.totalorder %v349, 1
      %v351 = vsel %vm350, %v341, %v345
      %v352 = vsel %vm350, %v342, %v346
      %v353 = vsel %vm350, %v343, %v347
      %v354 = vsel %vm350, %v344, %v348
      %v355 = vand.u32 %v312, 4
      %vm356 = vcmp.eq.s32.totalorder %v355, 0
      %vm357 = vmxor %vm316, %vm356
      %vm358 = vmxor %vm357, 1
      %359 = vrot.lane.b32.xlu0 %v351, 126
      %v360 = vpop.permute.xlu0 %359
      %361 = vrot.lane.b32.xlu0 %v352, 126
      %v362 = vpop.permute.xlu0 %361
      %363 = vrot.lane.b32.xlu0 %v353, 126
      %v364 = vpop.permute.xlu0 %363
      %365 = vrot.lane.b32.xlu0 %v354, 126
      %v366 = vpop.permute.xlu0 %365
      %367 = vrot.lane.b32.xlu0 %v351, 2
      %v368 = vpop.permute.xlu0 %367
      %369 = vrot.lane.b32.xlu0 %v352, 2
      %v370 = vpop.permute.xlu0 %369
      %371 = vrot.lane.b32.xlu0 %v353, 2
      %v372 = vpop.permute.xlu0 %371
      %373 = vrot.lane.b32.xlu0 %v354, 2
      %v374 = vpop.permute.xlu0 %373
      %v375 = vsel %vm316, 1, 0
      %vm376 = vcmp.eq.s32.totalorder %v375, 1
      %v377 = vsel %vm376, %v360, %v368
      %v378 = vsel %vm376, %v362, %v370
      %v379 = vsel %vm376, %v364, %v372
      %v380 = vsel %vm376, %v366, %v374
      %v381 = vmin.f32 %v351, %v377
      %v382 = vmin.f32 %v352, %v378
      %v383 = vmin.f32 %v353, %v379
      %v384 = vmin.f32 %v354, %v380
      %v385 = vmax.f32 %v351, %v377
      %v386 = vmax.f32 %v352, %v378
      %v387 = vmax.f32 %v353, %v379
      %v388 = vmax.f32 %v354, %v380
      %v389 = vsel %vm358, 1, 0
      %vm390 = vcmp.eq.s32.totalorder %v389, 1
      %v391 = vsel %vm390, %v381, %v385
      %v392 = vsel %vm390, %v382, %v386
      %v393 = vsel %vm390, %v383, %v387
      %v394 = vsel %vm390, %v384, %v388
      %vm395 = vmxor %vm314, %vm356
      %vm396 = vmxor %vm395, 1
      %397 = vrot.lane.b32.xlu0 %v391, 127
      %v398 = vpop.permute.xlu0 %397
      %399 = vrot.lane.b32.xlu0 %v392, 127
      %v400 = vpop.permute.xlu0 %399
      %401 = vrot.lane.b32.xlu0 %v393, 127
      %v402 = vpop.permute.xlu0 %401
      %403 = vrot.lane.b32.xlu0 %v394, 127
      %v404 = vpop.permute.xlu0 %403
      %405 = vrot.lane.b32.xlu0 %v391, 1
      %v406 = vpop.permute.xlu0 %405
      %407 = vrot.lane.b32.xlu0 %v392, 1
      %v408 = vpop.permute.xlu0 %407
      %409 = vrot.lane.b32.xlu0 %v393, 1
      %v410 = vpop.permute.xlu0 %409
      %411 = vrot.lane.b32.xlu0 %v394, 1
      %v412 = vpop.permute.xlu0 %411
      %v413 = vsel %vm336, %v398, %v406
      %v414 = vsel %vm336, %v400, %v408
      %v415 = vsel %vm336, %v402, %v410
      %v416 = vsel %vm336, %v404, %v412
      %v417 = vmin.f32 %v391, %v413
      %v418 = vmin.f32 %v392, %v414
      %v419 = vmin.f32 %v393, %v415
      %v420 = vmin.f32 %v394, %v416
      %v421 = vmax.f32 %v391, %v413
      %v422 = vmax.f32 %v392, %v414
      %v423 = vmax.f32 %v393, %v415
      %v424 = vmax.f32 %v394, %v416
      %v425 = vsel %vm396, 1, 0
      %vm426 = vcmp.eq.s32.totalorder %v425, 1
      %v427 = vsel %vm426, %v417, %v421
      %v428 = vsel %vm426, %v418, %v422
      %v429 = vsel %vm426, %v419, %v423
      %v430 = vsel %vm426, %v420, %v424
      %v431 = vand.u32 %v312, 8
      %vm432 = vcmp.eq.s32.totalorder %v431, 0
      %vm433 = vmxor %vm356, %vm432
      %vm434 = vmxor %vm433, 1
      %435 = vrot.lane.b32.xlu0 %v427, 124
      %v436 = vpop.permute.xlu0 %435
      %437 = vrot.lane.b32.xlu0 %v428, 124
      %v438 = vpop.permute.xlu0 %437
      %439 = vrot.lane.b32.xlu0 %v429, 124
      %v440 = vpop.permute.xlu0 %439
      %441 = vrot.lane.b32.xlu0 %v430, 124
      %v442 = vpop.permute.xlu0 %441
      %443 = vrot.lane.b32.xlu0 %v427, 4
      %v444 = vpop.permute.xlu0 %443
      %445 = vrot.lane.b32.xlu0 %v428, 4
      %v446 = vpop.permute.xlu0 %445
      %447 = vrot.lane.b32.xlu0 %v429, 4
      %v448 = vpop.permute.xlu0 %447
      %449 = vrot.lane.b32.xlu0 %v430, 4
      %v450 = vpop.permute.xlu0 %449
      %v451 = vsel %vm356, 1, 0
      %vm452 = vcmp.eq.s32.totalorder %v451, 1
      %v453 = vsel %vm452, %v436, %v444
      %v454 = vsel %vm452, %v438, %v446
      %v455 = vsel %vm452, %v440, %v448
      %v456 = vsel %vm452, %v442, %v450
      %v457 = vmin.f32 %v427, %v453
      %v458 = vmin.f32 %v428, %v454
      %v459 = vmin.f32 %v429, %v455
      %v460 = vmin.f32 %v430, %v456
      %v461 = vmax.f32 %v427, %v453
      %v462 = vmax.f32 %v428, %v454
      %v463 = vmax.f32 %v429, %v455
      %v464 = vmax.f32 %v430, %v456
      %v465 = vsel %vm434, 1, 0
      %vm466 = vcmp.eq.s32.totalorder %v465, 1
      %v467 = vsel %vm466, %v457, %v461
      %v468 = vsel %vm466, %v458, %v462
      %v469 = vsel %vm466, %v459, %v463
      %v470 = vsel %vm466, %v460, %v464
      %vm471 = vmxor %vm316, %vm432
      %vm472 = vmxor %vm471, 1
      %473 = vrot.lane.b32.xlu0 %v467, 126
      %v474 = vpop.permute.xlu0 %473
      %475 = vrot.lane.b32.xlu0 %v468, 126
      %v476 = vpop.permute.xlu0 %475
      %477 = vrot.lane.b32.xlu0 %v469, 126
      %v478 = vpop.permute.xlu0 %477
      %479 = vrot.lane.b32.xlu0 %v470, 126
      %v480 = vpop.permute.xlu0 %479
      %481 = vrot.lane.b32.xlu0 %v467, 2
      %v482 = vpop.permute.xlu0 %481
      %483 = vrot.lane.b32.xlu0 %v468, 2
      %v484 = vpop.permute.xlu0 %483
      %485 = vrot.lane.b32.xlu0 %v469, 2
      %v486 = vpop.permute.xlu0 %485
      %487 = vrot.lane.b32.xlu0 %v470, 2
      %v488 = vpop.permute.xlu0 %487
      %v489 = vsel %vm376, %v474, %v482
      %v490 = vsel %vm376, %v476, %v484
      %v491 = vsel %vm376, %v478, %v486
      %v492 = vsel %vm376, %v480, %v488
      %v493 = vmin.f32 %v467, %v489
      %v494 = vmin.f32 %v468, %v490
      %v495 = vmin.f32 %v469, %v491
      %v496 = vmin.f32 %v470, %v492
      %v497 = vmax.f32 %v467, %v489
      %v498 = vmax.f32 %v468, %v490
      %v499 = vmax.f32 %v469, %v491
      %v500 = vmax.f32 %v470, %v492
      %v501 = vsel %vm472, 1, 0
      %vm502 = vcmp.eq.s32.totalorder %v501, 1
      %v503 = vsel %vm502, %v493, %v497
      %v504 = vsel %vm502, %v494, %v498
      %v505 = vsel %vm502, %v495, %v499
      %v506 = vsel %vm502, %v496, %v500
      %vm507 = vmxor %vm314, %vm432
      %vm508 = vmxor %vm507, 1
      %509 = vrot.lane.b32.xlu0 %v503, 127
      %v510 = vpop.permute.xlu0 %509
      %511 = vrot.lane.b32.xlu0 %v504, 127
      %v512 = vpop.permute.xlu0 %511
      %513 = vrot.lane.b32.xlu0 %v505, 127
      %v514 = vpop.permute.xlu0 %513
      %515 = vrot.lane.b32.xlu0 %v506, 127
      %v516 = vpop.permute.xlu0 %515
      %517 = vrot.lane.b32.xlu0 %v503, 1
      %v518 = vpop.permute.xlu0 %517
      %519 = vrot.lane.b32.xlu0 %v504, 1
      %v520 = vpop.permute.xlu0 %519
      %521 = vrot.lane.b32.xlu0 %v505, 1
      %v522 = vpop.permute.xlu0 %521
      %523 = vrot.lane.b32.xlu0 %v506, 1
      %v524 = vpop.permute.xlu0 %523
      %v525 = vsel %vm336, %v510, %v518
      %v526 = vsel %vm336, %v512, %v520
      %v527 = vsel %vm336, %v514, %v522
      %v528 = vsel %vm336, %v516, %v524
      %v529 = vmin.f32 %v503, %v525
      %v530 = vmin.f32 %v504, %v526
      %v531 = vmin.f32 %v505, %v527
      %v532 = vmin.f32 %v506, %v528
      %v533 = vmax.f32 %v503, %v525
      %v534 = vmax.f32 %v504, %v526
      %v535 = vmax.f32 %v505, %v527
      %v536 = vmax.f32 %v506, %v528
      %v537 = vsel %vm508, 1, 0
      %vm538 = vcmp.eq.s32.totalorder %v537, 1
      %v539 = vsel %vm538, %v529, %v533
      %v540 = vsel %vm538, %v530, %v534
      %v541 = vsel %vm538, %v531, %v535
      %v542 = vsel %vm538, %v532, %v536
      %v543 = vand.u32 %v312, 16
      %vm544 = vcmp.eq.s32.totalorder %v543, 0
      %vm545 = vmxor %vm432, %vm544
      %vm546 = vmxor %vm545, 1
      %547 = vrot.lane.b32.xlu0 %v539, 120
      %v548 = vpop.permute.xlu0 %547
      %549 = vrot.lane.b32.xlu0 %v540, 120
      %v550 = vpop.permute.xlu0 %549
      %551 = vrot.lane.b32.xlu0 %v541, 120
      %v552 = vpop.permute.xlu0 %551
      %553 = vrot.lane.b32.xlu0 %v542, 120
      %v554 = vpop.permute.xlu0 %553
      %555 = vrot.lane.b32.xlu0 %v539, 8
      %v556 = vpop.permute.xlu0 %555
      %557 = vrot.lane.b32.xlu0 %v540, 8
      %v558 = vpop.permute.xlu0 %557
      %559 = vrot.lane.b32.xlu0 %v541, 8
      %v560 = vpop.permute.xlu0 %559
      %561 = vrot.lane.b32.xlu0 %v542, 8
      %v562 = vpop.permute.xlu0 %561
      %v563 = vsel %vm432, 1, 0
      %vm564 = vcmp.eq.s32.totalorder %v563, 1
      %v565 = vsel %vm564, %v548, %v556
      %v566 = vsel %vm564, %v550, %v558
      %v567 = vsel %vm564, %v552, %v560
      %v568 = vsel %vm564, %v554, %v562
      %v569 = vmin.f32 %v539, %v565
      %v570 = vmin.f32 %v540, %v566
      %v571 = vmin.f32 %v541, %v567
      %v572 = vmin.f32 %v542, %v568
      %v573 = vmax.f32 %v539, %v565
      %v574 = vmax.f32 %v540, %v566
      %v575 = vmax.f32 %v541, %v567
      %v576 = vmax.f32 %v542, %v568
      %v577 = vsel %vm546, 1, 0
      %vm578 = vcmp.eq.s32.totalorder %v577, 1
      %v579 = vsel %vm578, %v569, %v573
      %v580 = vsel %vm578, %v570, %v574
      %v581 = vsel %vm578, %v571, %v575
      %v582 = vsel %vm578, %v572, %v576
      %vm583 = vmxor %vm356, %vm544
      %vm584 = vmxor %vm583, 1
      %585 = vrot.lane.b32.xlu0 %v579, 124
      %v586 = vpop.permute.xlu0 %585
      %587 = vrot.lane.b32.xlu0 %v580, 124
      %v588 = vpop.permute.xlu0 %587
      %589 = vrot.lane.b32.xlu0 %v581, 124
      %v590 = vpop.permute.xlu0 %589
      %591 = vrot.lane.b32.xlu0 %v582, 124
      %v592 = vpop.permute.xlu0 %591
      %593 = vrot.lane.b32.xlu0 %v579, 4
      %v594 = vpop.permute.xlu0 %593
      %595 = vrot.lane.b32.xlu0 %v580, 4
      %v596 = vpop.permute.xlu0 %595
      %597 = vrot.lane.b32.xlu0 %v581, 4
      %v598 = vpop.permute.xlu0 %597
      %599 = vrot.lane.b32.xlu0 %v582, 4
      %v600 = vpop.permute.xlu0 %599
      %v601 = vsel %vm452, %v586, %v594
      %v602 = vsel %vm452, %v588, %v596
      %v603 = vsel %vm452, %v590, %v598
      %v604 = vsel %vm452, %v592, %v600
      %v605 = vmin.f32 %v579, %v601
      %v606 = vmin.f32 %v580, %v602
      %v607 = vmin.f32 %v581, %v603
      %v608 = vmin.f32 %v582, %v604
      %v609 = vmax.f32 %v579, %v601
      %v610 = vmax.f32 %v580, %v602
      %v611 = vmax.f32 %v581, %v603
      %v612 = vmax.f32 %v582, %v604
      %v613 = vsel %vm584, 1, 0
      %vm614 = vcmp.eq.s32.totalorder %v613, 1
      %v615 = vsel %vm614, %v605, %v609
      %v616 = vsel %vm614, %v606, %v610
      %v617 = vsel %vm614, %v607, %v611
      %v618 = vsel %vm614, %v608, %v612
      %vm619 = vmxor %vm316, %vm544
      %vm620 = vmxor %vm619, 1
      %621 = vrot.lane.b32.xlu0 %v615, 126
      %v622 = vpop.permute.xlu0 %621
      %623 = vrot.lane.b32.xlu0 %v616, 126
      %v624 = vpop.permute.xlu0 %623
      %625 = vrot.lane.b32.xlu0 %v617, 126
      %v626 = vpop.permute.xlu0 %625
      %627 = vrot.lane.b32.xlu0 %v618, 126
      %v628 = vpop.permute.xlu0 %627
      %629 = vrot.lane.b32.xlu0 %v615, 2
      %v630 = vpop.permute.xlu0 %629
      %631 = vrot.lane.b32.xlu0 %v616, 2
      %v632 = vpop.permute.xlu0 %631
      %633 = vrot.lane.b32.xlu0 %v617, 2
      %v634 = vpop.permute.xlu0 %633
      %635 = vrot.lane.b32.xlu0 %v618, 2
      %v636 = vpop.permute.xlu0 %635
      %v637 = vsel %vm376, %v622, %v630
      %v638 = vsel %vm376, %v624, %v632
      %v639 = vsel %vm376, %v626, %v634
      %v640 = vsel %vm376, %v628, %v636
      %v641 = vmin.f32 %v615, %v637
      %v642 = vmin.f32 %v616, %v638
      %v643 = vmin.f32 %v617, %v639
      %v644 = vmin.f32 %v618, %v640
      %v645 = vmax.f32 %v615, %v637
      %v646 = vmax.f32 %v616, %v638
      %v647 = vmax.f32 %v617, %v639
      %v648 = vmax.f32 %v618, %v640
      %v649 = vsel %vm620, 1, 0
      %vm650 = vcmp.eq.s32.totalorder %v649, 1
      %v651 = vsel %vm650, %v641, %v645
      %v652 = vsel %vm650, %v642, %v646
      %v653 = vsel %vm650, %v643, %v647
      %v654 = vsel %vm650, %v644, %v648
      %vm655 = vmxor %vm314, %vm544
      %vm656 = vmxor %vm655, 1
      %657 = vrot.lane.b32.xlu0 %v651, 127
      %v658 = vpop.permute.xlu0 %657
      %659 = vrot.lane.b32.xlu0 %v652, 127
      %v660 = vpop.permute.xlu0 %659
      %661 = vrot.lane.b32.xlu0 %v653, 127
      %v662 = vpop.permute.xlu0 %661
      %663 = vrot.lane.b32.xlu0 %v654, 127
      %v664 = vpop.permute.xlu0 %663
      %665 = vrot.lane.b32.xlu0 %v651, 1
      %v666 = vpop.permute.xlu0 %665
      %667 = vrot.lane.b32.xlu0 %v652, 1
      %v668 = vpop.permute.xlu0 %667
      %669 = vrot.lane.b32.xlu0 %v653, 1
      %v670 = vpop.permute.xlu0 %669
      %671 = vrot.lane.b32.xlu0 %v654, 1
      %v672 = vpop.permute.xlu0 %671
      %v673 = vsel %vm336, %v658, %v666
      %v674 = vsel %vm336, %v660, %v668
      %v675 = vsel %vm336, %v662, %v670
      %v676 = vsel %vm336, %v664, %v672
      %v677 = vmin.f32 %v651, %v673
      %v678 = vmin.f32 %v652, %v674
      %v679 = vmin.f32 %v653, %v675
      %v680 = vmin.f32 %v654, %v676
      %v681 = vmax.f32 %v651, %v673
      %v682 = vmax.f32 %v652, %v674
      %v683 = vmax.f32 %v653, %v675
      %v684 = vmax.f32 %v654, %v676
      %v685 = vsel %vm656, 1, 0
      %vm686 = vcmp.eq.s32.totalorder %v685, 1
      %v687 = vsel %vm686, %v677, %v681
      %v688 = vsel %vm686, %v678, %v682
      %v689 = vsel %vm686, %v679, %v683
      %v690 = vsel %vm686, %v680, %v684
      %v691 = vand.u32 %v312, 32
      %vm692 = vcmp.eq.s32.totalorder %v691, 0
      %vm693 = vmxor %vm544, %vm692
      %vm694 = vmxor %vm693, 1
      %695 = vrot.lane.b32.xlu0 %v687, 112
      %v696 = vpop.permute.xlu0 %695
      %697 = vrot.lane.b32.xlu0 %v688, 112
      %v698 = vpop.permute.xlu0 %697
      %699 = vrot.lane.b32.xlu0 %v689, 112
      %v700 = vpop.permute.xlu0 %699
      %701 = vrot.lane.b32.xlu0 %v690, 112
      %v702 = vpop.permute.xlu0 %701
      %703 = vrot.lane.b32.xlu0 %v687, 16
      %v704 = vpop.permute.xlu0 %703
      %705 = vrot.lane.b32.xlu0 %v688, 16
      %v706 = vpop.permute.xlu0 %705
      %707 = vrot.lane.b32.xlu0 %v689, 16
      %v708 = vpop.permute.xlu0 %707
      %709 = vrot.lane.b32.xlu0 %v690, 16
      %v710 = vpop.permute.xlu0 %709
      %v711 = vsel %vm544, 1, 0
      %vm712 = vcmp.eq.s32.totalorder %v711, 1
      %v713 = vsel %vm712, %v696, %v704
      %v714 = vsel %vm712, %v698, %v706
      %v715 = vsel %vm712, %v700, %v708
      %v716 = vsel %vm712, %v702, %v710
      %v717 = vmin.f32 %v687, %v713
      %v718 = vmin.f32 %v688, %v714
      %v719 = vmin.f32 %v689, %v715
      %v720 = vmin.f32 %v690, %v716
      %v721 = vmax.f32 %v687, %v713
      %v722 = vmax.f32 %v688, %v714
      %v723 = vmax.f32 %v689, %v715
      %v724 = vmax.f32 %v690, %v716
      %v725 = vsel %vm694, 1, 0
      %vm726 = vcmp.eq.s32.totalorder %v725, 1
      %v727 = vsel %vm726, %v717, %v721
      %v728 = vsel %vm726, %v718, %v722
      %v729 = vsel %vm726, %v719, %v723
      %v730 = vsel %vm726, %v720, %v724
      %vm731 = vmxor %vm432, %vm692
      %vm732 = vmxor %vm731, 1
      %733 = vrot.lane.b32.xlu0 %v727, 120
      %v734 = vpop.permute.xlu0 %733
      %735 = vrot.lane.b32.xlu0 %v728, 120
      %v736 = vpop.permute.xlu0 %735
      %737 = vrot.lane.b32.xlu0 %v729, 120
      %v738 = vpop.permute.xlu0 %737
      %739 = vrot.lane.b32.xlu0 %v730, 120
      %v740 = vpop.permute.xlu0 %739
      %741 = vrot.lane.b32.xlu0 %v727, 8
      %v742 = vpop.permute.xlu0 %741
      %743 = vrot.lane.b32.xlu0 %v728, 8
      %v744 = vpop.permute.xlu0 %743
      %745 = vrot.lane.b32.xlu0 %v729, 8
      %v746 = vpop.permute.xlu0 %745
      %747 = vrot.lane.b32.xlu0 %v730, 8
      %v748 = vpop.permute.xlu0 %747
      %v749 = vsel %vm564, %v734, %v742
      %v750 = vsel %vm564, %v736, %v744
      %v751 = vsel %vm564, %v738, %v746
      %v752 = vsel %vm564, %v740, %v748
      %v753 = vmin.f32 %v727, %v749
      %v754 = vmin.f32 %v728, %v750
      %v755 = vmin.f32 %v729, %v751
      %v756 = vmin.f32 %v730, %v752
      %v757 = vmax.f32 %v727, %v749
      %v758 = vmax.f32 %v728, %v750
      %v759 = vmax.f32 %v729, %v751
      %v760 = vmax.f32 %v730, %v752
      %v761 = vsel %vm732, 1, 0
      %vm762 = vcmp.eq.s32.totalorder %v761, 1
      %v763 = vsel %vm762, %v753, %v757
      %v764 = vsel %vm762, %v754, %v758
      %v765 = vsel %vm762, %v755, %v759
      %v766 = vsel %vm762, %v756, %v760
      %vm767 = vmxor %vm356, %vm692
      %vm768 = vmxor %vm767, 1
      %769 = vrot.lane.b32.xlu0 %v763, 124
      %v770 = vpop.permute.xlu0 %769
      %771 = vrot.lane.b32.xlu0 %v764, 124
      %v772 = vpop.permute.xlu0 %771
      %773 = vrot.lane.b32.xlu0 %v765, 124
      %v774 = vpop.permute.xlu0 %773
      %775 = vrot.lane.b32.xlu0 %v766, 124
      %v776 = vpop.permute.xlu0 %775
      %777 = vrot.lane.b32.xlu0 %v763, 4
      %v778 = vpop.permute.xlu0 %777
      %779 = vrot.lane.b32.xlu0 %v764, 4
      %v780 = vpop.permute.xlu0 %779
      %781 = vrot.lane.b32.xlu0 %v765, 4
      %v782 = vpop.permute.xlu0 %781
      %783 = vrot.lane.b32.xlu0 %v766, 4
      %v784 = vpop.permute.xlu0 %783
      %v785 = vsel %vm452, %v770, %v778
      %v786 = vsel %vm452, %v772, %v780
      %v787 = vsel %vm452, %v774, %v782
      %v788 = vsel %vm452, %v776, %v784
      %v789 = vmin.f32 %v763, %v785
      %v790 = vmin.f32 %v764, %v786
      %v791 = vmin.f32 %v765, %v787
      %v792 = vmin.f32 %v766, %v788
      %v793 = vmax.f32 %v763, %v785
      %v794 = vmax.f32 %v764, %v786
      %v795 = vmax.f32 %v765, %v787
      %v796 = vmax.f32 %v766, %v788
      %v797 = vsel %vm768, 1, 0
      %vm798 = vcmp.eq.s32.totalorder %v797, 1
      %v799 = vsel %vm798, %v789, %v793
      %v800 = vsel %vm798, %v790, %v794
      %v801 = vsel %vm798, %v791, %v795
      %v802 = vsel %vm798, %v792, %v796
      %vm803 = vmxor %vm316, %vm692
      %vm804 = vmxor %vm803, 1
      %805 = vrot.lane.b32.xlu0 %v799, 126
      %v806 = vpop.permute.xlu0 %805
      %807 = vrot.lane.b32.xlu0 %v800, 126
      %v808 = vpop.permute.xlu0 %807
      %809 = vrot.lane.b32.xlu0 %v801, 126
      %v810 = vpop.permute.xlu0 %809
      %811 = vrot.lane.b32.xlu0 %v802, 126
      %v812 = vpop.permute.xlu0 %811
      %813 = vrot.lane.b32.xlu0 %v799, 2
      %v814 = vpop.permute.xlu0 %813
      %815 = vrot.lane.b32.xlu0 %v800, 2
      %v816 = vpop.permute.xlu0 %815
      %817 = vrot.lane.b32.xlu0 %v801, 2
      %v818 = vpop.permute.xlu0 %817
      %819 = vrot.lane.b32.xlu0 %v802, 2
      %v820 = vpop.permute.xlu0 %819
      %v821 = vsel %vm376, %v806, %v814
      %v822 = vsel %vm376, %v808, %v816
      %v823 = vsel %vm376, %v810, %v818
      %v824 = vsel %vm376, %v812, %v820
      %v825 = vmin.f32 %v799, %v821
      %v826 = vmin.f32 %v800, %v822
      %v827 = vmin.f32 %v801, %v823
      %v828 = vmin.f32 %v802, %v824
      %v829 = vmax.f32 %v799, %v821
      %v830 = vmax.f32 %v800, %v822
      %v831 = vmax.f32 %v801, %v823
      %v832 = vmax.f32 %v802, %v824
      %v833 = vsel %vm804, 1, 0
      %vm834 = vcmp.eq.s32.totalorder %v833, 1
      %v835 = vsel %vm834, %v825, %v829
      %v836 = vsel %vm834, %v826, %v830
      %v837 = vsel %vm834, %v827, %v831
      %v838 = vsel %vm834, %v828, %v832
      %vm839 = vmxor %vm314, %vm692
      %vm840 = vmxor %vm839, 1
      %841 = vrot.lane.b32.xlu0 %v835, 127
      %v842 = vpop.permute.xlu0 %841
      %843 = vrot.lane.b32.xlu0 %v836, 127
      %v844 = vpop.permute.xlu0 %843
      %845 = vrot.lane.b32.xlu0 %v837, 127
      %v846 = vpop.permute.xlu0 %845
      %847 = vrot.lane.b32.xlu0 %v838, 127
      %v848 = vpop.permute.xlu0 %847
      %849 = vrot.lane.b32.xlu0 %v835, 1
      %v850 = vpop.permute.xlu0 %849
      %851 = vrot.lane.b32.xlu0 %v836, 1
      %v852 = vpop.permute.xlu0 %851
      %853 = vrot.lane.b32.xlu0 %v837, 1
      %v854 = vpop.permute.xlu0 %853
      %855 = vrot.lane.b32.xlu0 %v838, 1
      %v856 = vpop.permute.xlu0 %855
      %v857 = vsel %vm336, %v842, %v850
      %v858 = vsel %vm336, %v844, %v852
      %v859 = vsel %vm336, %v846, %v854
      %v860 = vsel %vm336, %v848, %v856
      %v861 = vmin.f32 %v835, %v857
      %v862 = vmin.f32 %v836, %v858
      %v863 = vmin.f32 %v837, %v859
      %v864 = vmin.f32 %v838, %v860
      %v865 = vmax.f32 %v835, %v857
      %v866 = vmax.f32 %v836, %v858
      %v867 = vmax.f32 %v837, %v859
      %v868 = vmax.f32 %v838, %v860
      %v869 = vsel %vm840, 1, 0
      %vm870 = vcmp.eq.s32.totalorder %v869, 1
      %v871 = vsel %vm870, %v861, %v865
      %v872 = vsel %vm870, %v862, %v866
      %v873 = vsel %vm870, %v863, %v867
      %v874 = vsel %vm870, %v864, %v868
      %v875 = vand.u32 %v312, 64
      %vm876 = vcmp.eq.s32.totalorder %v875, 0
      %vm877 = vmxor %vm692, %vm876
      %vm878 = vmxor %vm877, 1
      %879 = vrot.lane.b32.xlu0 %v871, 96
      %v880 = vpop.permute.xlu0 %879
      %881 = vrot.lane.b32.xlu0 %v872, 96
      %v882 = vpop.permute.xlu0 %881
      %883 = vrot.lane.b32.xlu0 %v873, 96
      %v884 = vpop.permute.xlu0 %883
      %885 = vrot.lane.b32.xlu0 %v874, 96
      %v886 = vpop.permute.xlu0 %885
      %887 = vrot.lane.b32.xlu0 %v871, 32
      %v888 = vpop.permute.xlu0 %887
      %889 = vrot.lane.b32.xlu0 %v872, 32
      %v890 = vpop.permute.xlu0 %889
      %891 = vrot.lane.b32.xlu0 %v873, 32
      %v892 = vpop.permute.xlu0 %891
      %893 = vrot.lane.b32.xlu0 %v874, 32
      %v894 = vpop.permute.xlu0 %893
      %v895 = vsel %vm692, 1, 0
      %vm896 = vcmp.eq.s32.totalorder %v895, 1
      %v897 = vsel %vm896, %v880, %v888
      %v898 = vsel %vm896, %v882, %v890
      %v899 = vsel %vm896, %v884, %v892
      %v900 = vsel %vm896, %v886, %v894
      %v901 = vmin.f32 %v871, %v897
      %v902 = vmin.f32 %v872, %v898
      %v903 = vmin.f32 %v873, %v899
      %v904 = vmin.f32 %v874, %v900
      %v905 = vmax.f32 %v871, %v897
      %v906 = vmax.f32 %v872, %v898
      %v907 = vmax.f32 %v873, %v899
      %v908 = vmax.f32 %v874, %v900
      %v909 = vsel %vm878, 1, 0
      %vm910 = vcmp.eq.s32.totalorder %v909, 1
      %v911 = vsel %vm910, %v901, %v905
      %v912 = vsel %vm910, %v902, %v906
      %v913 = vsel %vm910, %v903, %v907
      %v914 = vsel %vm910, %v904, %v908
      %vm915 = vmxor %vm544, %vm876
      %vm916 = vmxor %vm915, 1
      %917 = vrot.lane.b32.xlu0 %v911, 112
      %v918 = vpop.permute.xlu0 %917
      %919 = vrot.lane.b32.xlu0 %v912, 112
      %v920 = vpop.permute.xlu0 %919
      %921 = vrot.lane.b32.xlu0 %v913, 112
      %v922 = vpop.permute.xlu0 %921
      %923 = vrot.lane.b32.xlu0 %v914, 112
      %v924 = vpop.permute.xlu0 %923
      %925 = vrot.lane.b32.xlu0 %v911, 16
      %v926 = vpop.permute.xlu0 %925
      %927 = vrot.lane.b32.xlu0 %v912, 16
      %v928 = vpop.permute.xlu0 %927
      %929 = vrot.lane.b32.xlu0 %v913, 16
      %v930 = vpop.permute.xlu0 %929
      %931 = vrot.lane.b32.xlu0 %v914, 16
      %v932 = vpop.permute.xlu0 %931
      %v933 = vsel %vm712, %v918, %v926
      %v934 = vsel %vm712, %v920, %v928
      %v935 = vsel %vm712, %v922, %v930
      %v936 = vsel %vm712, %v924, %v932
      %v937 = vmin.f32 %v911, %v933
      %v938 = vmin.f32 %v912, %v934
      %v939 = vmin.f32 %v913, %v935
      %v940 = vmin.f32 %v914, %v936
      %v941 = vmax.f32 %v911, %v933
      %v942 = vmax.f32 %v912, %v934
      %v943 = vmax.f32 %v913, %v935
      %v944 = vmax.f32 %v914, %v936
      %v945 = vsel %vm916, 1, 0
      %vm946 = vcmp.eq.s32.totalorder %v945, 1
      %v947 = vsel %vm946, %v937, %v941
      %v948 = vsel %vm946, %v938, %v942
      %v949 = vsel %vm946, %v939, %v943
      %v950 = vsel %vm946, %v940, %v944
      %vm951 = vmxor %vm432, %vm876
      %vm952 = vmxor %vm951, 1
      %953 = vrot.lane.b32.xlu0 %v947, 120
      %v954 = vpop.permute.xlu0 %953
      %955 = vrot.lane.b32.xlu0 %v948, 120
      %v956 = vpop.permute.xlu0 %955
      %957 = vrot.lane.b32.xlu0 %v949, 120
      %v958 = vpop.permute.xlu0 %957
      %959 = vrot.lane.b32.xlu0 %v950, 120
      %v960 = vpop.permute.xlu0 %959
      %961 = vrot.lane.b32.xlu0 %v947, 8
      %v962 = vpop.permute.xlu0 %961
      %963 = vrot.lane.b32.xlu0 %v948, 8
      %v964 = vpop.permute.xlu0 %963
      %965 = vrot.lane.b32.xlu0 %v949, 8
      %v966 = vpop.permute.xlu0 %965
      %967 = vrot.lane.b32.xlu0 %v950, 8
      %v968 = vpop.permute.xlu0 %967
      %v969 = vsel %vm564, %v954, %v962
      %v970 = vsel %vm564, %v956, %v964
      %v971 = vsel %vm564, %v958, %v966
      %v972 = vsel %vm564, %v960, %v968
      %v973 = vmin.f32 %v947, %v969
      %v974 = vmin.f32 %v948, %v970
      %v975 = vmin.f32 %v949, %v971
      %v976 = vmin.f32 %v950, %v972
      %v977 = vmax.f32 %v947, %v969
      %v978 = vmax.f32 %v948, %v970
      %v979 = vmax.f32 %v949, %v971
      %v980 = vmax.f32 %v950, %v972
      %v981 = vsel %vm952, 1, 0
      %vm982 = vcmp.eq.s32.totalorder %v981, 1
      %v983 = vsel %vm982, %v973, %v977
      %v984 = vsel %vm982, %v974, %v978
      %v985 = vsel %vm982, %v975, %v979
      %v986 = vsel %vm982, %v976, %v980
      %vm987 = vmxor %vm356, %vm876
      %vm988 = vmxor %vm987, 1
      %989 = vrot.lane.b32.xlu0 %v983, 124
      %v990 = vpop.permute.xlu0 %989
      %991 = vrot.lane.b32.xlu0 %v984, 124
      %v992 = vpop.permute.xlu0 %991
      %993 = vrot.lane.b32.xlu0 %v985, 124
      %v994 = vpop.permute.xlu0 %993
      %995 = vrot.lane.b32.xlu0 %v986, 124
      %v996 = vpop.permute.xlu0 %995
      %997 = vrot.lane.b32.xlu0 %v983, 4
      %v998 = vpop.permute.xlu0 %997
      %999 = vrot.lane.b32.xlu0 %v984, 4
      %v1000 = vpop.permute.xlu0 %999
      %1001 = vrot.lane.b32.xlu0 %v985, 4
      %v1002 = vpop.permute.xlu0 %1001
      %1003 = vrot.lane.b32.xlu0 %v986, 4
      %v1004 = vpop.permute.xlu0 %1003
      %v1005 = vsel %vm452, %v990, %v998
      %v1006 = vsel %vm452, %v992, %v1000
      %v1007 = vsel %vm452, %v994, %v1002
      %v1008 = vsel %vm452, %v996, %v1004
      %v1009 = vmin.f32 %v983, %v1005
      %v1010 = vmin.f32 %v984, %v1006
      %v1011 = vmin.f32 %v985, %v1007
      %v1012 = vmin.f32 %v986, %v1008
      %v1013 = vmax.f32 %v983, %v1005
      %v1014 = vmax.f32 %v984, %v1006
      %v1015 = vmax.f32 %v985, %v1007
      %v1016 = vmax.f32 %v986, %v1008
      %v1017 = vsel %vm988, 1, 0
      %vm1018 = vcmp.eq.s32.totalorder %v1017, 1
      %v1019 = vsel %vm1018, %v1009, %v1013
      %v1020 = vsel %vm1018, %v1010, %v1014
      %v1021 = vsel %vm1018, %v1011, %v1015
      %v1022 = vsel %vm1018, %v1012, %v1016
      %vm1023 = vmxor %vm316, %vm876
      %vm1024 = vmxor %vm1023, 1
      %1025 = vrot.lane.b32.xlu0 %v1019, 126
      %v1026 = vpop.permute.xlu0 %1025
      %1027 = vrot.lane.b32.xlu0 %v1020, 126
      %v1028 = vpop.permute.xlu0 %1027
      %1029 = vrot.lane.b32.xlu0 %v1021, 126
      %v1030 = vpop.permute.xlu0 %1029
      %1031 = vrot.lane.b32.xlu0 %v1022, 126
      %v1032 = vpop.permute.xlu0 %1031
      %1033 = vrot.lane.b32.xlu0 %v1019, 2
      %v1034 = vpop.permute.xlu0 %1033
      %1035 = vrot.lane.b32.xlu0 %v1020, 2
      %v1036 = vpop.permute.xlu0 %1035
      %1037 = vrot.lane.b32.xlu0 %v1021, 2
      %v1038 = vpop.permute.xlu0 %1037
      %1039 = vrot.lane.b32.xlu0 %v1022, 2
      %v1040 = vpop.permute.xlu0 %1039
      %v1041 = vsel %vm376, %v1026, %v1034
      %v1042 = vsel %vm376, %v1028, %v1036
      %v1043 = vsel %vm376, %v1030, %v1038
      %v1044 = vsel %vm376, %v1032, %v1040
      %v1045 = vmin.f32 %v1019, %v1041
      %v1046 = vmin.f32 %v1020, %v1042
      %v1047 = vmin.f32 %v1021, %v1043
      %v1048 = vmin.f32 %v1022, %v1044
      %v1049 = vmax.f32 %v1019, %v1041
      %v1050 = vmax.f32 %v1020, %v1042
      %v1051 = vmax.f32 %v1021, %v1043
      %v1052 = vmax.f32 %v1022, %v1044
      %v1053 = vsel %vm1024, 1, 0
      %vm1054 = vcmp.eq.s32.totalorder %v1053, 1
      %v1055 = vsel %vm1054, %v1045, %v1049
      %v1056 = vsel %vm1054, %v1046, %v1050
      %v1057 = vsel %vm1054, %v1047, %v1051
      %v1058 = vsel %vm1054, %v1048, %v1052
      %vm1059 = vmxor %vm314, %vm876
      %vm1060 = vmxor %vm1059, 1
      %1061 = vrot.lane.b32.xlu0 %v1055, 127
      %v1062 = vpop.permute.xlu0 %1061
      %1063 = vrot.lane.b32.xlu0 %v1056, 127
      %v1064 = vpop.permute.xlu0 %1063
      %1065 = vrot.lane.b32.xlu0 %v1057, 127
      %v1066 = vpop.permute.xlu0 %1065
      %1067 = vrot.lane.b32.xlu0 %v1058, 127
      %v1068 = vpop.permute.xlu0 %1067
      %1069 = vrot.lane.b32.xlu0 %v1055, 1
      %v1070 = vpop.permute.xlu0 %1069
      %1071 = vrot.lane.b32.xlu0 %v1056, 1
      %v1072 = vpop.permute.xlu0 %1071
      %1073 = vrot.lane.b32.xlu0 %v1057, 1
      %v1074 = vpop.permute.xlu0 %1073
      %1075 = vrot.lane.b32.xlu0 %v1058, 1
      %v1076 = vpop.permute.xlu0 %1075
      %v1077 = vsel %vm336, %v1062, %v1070
      %v1078 = vsel %vm336, %v1064, %v1072
      %v1079 = vsel %vm336, %v1066, %v1074
      %v1080 = vsel %vm336, %v1068, %v1076
      %v1081 = vmin.f32 %v1055, %v1077
      %v1082 = vmin.f32 %v1056, %v1078
      %v1083 = vmin.f32 %v1057, %v1079
      %v1084 = vmin.f32 %v1058, %v1080
      %v1085 = vmax.f32 %v1055, %v1077
      %v1086 = vmax.f32 %v1056, %v1078
      %v1087 = vmax.f32 %v1057, %v1079
      %v1088 = vmax.f32 %v1058, %v1080
      %v1089 = vsel %vm1060, 1, 0
      %vm1090 = vcmp.eq.s32.totalorder %v1089, 1
      %v1091 = vsel %vm1090, %v1081, %v1085
      %v1092 = vsel %vm1090, %v1082, %v1086
      %v1093 = vsel %vm1090, %v1083, %v1087
      %v1094 = vsel %vm1090, %v1084, %v1088
      %v1095 = vand.u32 %v312, 128
      %vm1096 = vcmp.eq.s32.totalorder %v1095, 0
      %vm1097 = vmxor %vm876, %vm1096
      %vm1098 = vmxor %vm1097, 1
      %1099 = vrot.lane.b32.xlu0 %v1091, 64
      %v1100 = vpop.permute.xlu0 %1099
      %1101 = vrot.lane.b32.xlu0 %v1092, 64
      %v1102 = vpop.permute.xlu0 %1101
      %1103 = vrot.lane.b32.xlu0 %v1093, 64
      %v1104 = vpop.permute.xlu0 %1103
      %1105 = vrot.lane.b32.xlu0 %v1094, 64
      %v1106 = vpop.permute.xlu0 %1105
      %v1107 = vmin.f32 %v1091, %v1100
      %v1108 = vmin.f32 %v1092, %v1102
      %v1109 = vmin.f32 %v1093, %v1104
      %v1110 = vmin.f32 %v1094, %v1106
      %v1111 = vmax.f32 %v1091, %v1100
      %v1112 = vmax.f32 %v1092, %v1102
      %v1113 = vmax.f32 %v1093, %v1104
      %v1114 = vmax.f32 %v1094, %v1106
      %v1115 = vsel %vm1098, 1, 0
      %vm1116 = vcmp.eq.s32.totalorder %v1115, 1
      %v1117 = vsel %vm1116, %v1107, %v1111
      %v1118 = vsel %vm1116, %v1108, %v1112
      %v1119 = vsel %vm1116, %v1109, %v1113
      %v1120 = vsel %vm1116, %v1110, %v1114
      %vm1121 = vmxor %vm692, %vm1096
      %vm1122 = vmxor %vm1121, 1
      %1123 = vrot.lane.b32.xlu0 %v1117, 96
      %v1124 = vpop.permute.xlu0 %1123
      %1125 = vrot.lane.b32.xlu0 %v1118, 96
      %v1126 = vpop.permute.xlu0 %1125
      %1127 = vrot.lane.b32.xlu0 %v1119, 96
      %v1128 = vpop.permute.xlu0 %1127
      %1129 = vrot.lane.b32.xlu0 %v1120, 96
      %v1130 = vpop.permute.xlu0 %1129
      %1131 = vrot.lane.b32.xlu0 %v1117, 32
      %v1132 = vpop.permute.xlu0 %1131
      %1133 = vrot.lane.b32.xlu0 %v1118, 32
      %v1134 = vpop.permute.xlu0 %1133
      %1135 = vrot.lane.b32.xlu0 %v1119, 32
      %v1136 = vpop.permute.xlu0 %1135
      %1137 = vrot.lane.b32.xlu0 %v1120, 32
      %v1138 = vpop.permute.xlu0 %1137
      %v1139 = vsel %vm896, %v1124, %v1132
      %v1140 = vsel %vm896, %v1126, %v1134
      %v1141 = vsel %vm896, %v1128, %v1136
      %v1142 = vsel %vm896, %v1130, %v1138
      %v1143 = vmin.f32 %v1117, %v1139
      %v1144 = vmin.f32 %v1118, %v1140
      %v1145 = vmin.f32 %v1119, %v1141
      %v1146 = vmin.f32 %v1120, %v1142
      %v1147 = vmax.f32 %v1117, %v1139
      %v1148 = vmax.f32 %v1118, %v1140
      %v1149 = vmax.f32 %v1119, %v1141
      %v1150 = vmax.f32 %v1120, %v1142
      %v1151 = vsel %vm1122, 1, 0
      %vm1152 = vcmp.eq.s32.totalorder %v1151, 1
      %v1153 = vsel %vm1152, %v1143, %v1147
      %v1154 = vsel %vm1152, %v1144, %v1148
      %v1155 = vsel %vm1152, %v1145, %v1149
      %v1156 = vsel %vm1152, %v1146, %v1150
      %vm1157 = vmxor %vm544, %vm1096
      %vm1158 = vmxor %vm1157, 1
      %1159 = vrot.lane.b32.xlu0 %v1153, 112
      %v1160 = vpop.permute.xlu0 %1159
      %1161 = vrot.lane.b32.xlu0 %v1154, 112
      %v1162 = vpop.permute.xlu0 %1161
      %1163 = vrot.lane.b32.xlu0 %v1155, 112
      %v1164 = vpop.permute.xlu0 %1163
      %1165 = vrot.lane.b32.xlu0 %v1156, 112
      %v1166 = vpop.permute.xlu0 %1165
      %1167 = vrot.lane.b32.xlu0 %v1153, 16
      %v1168 = vpop.permute.xlu0 %1167
      %1169 = vrot.lane.b32.xlu0 %v1154, 16
      %v1170 = vpop.permute.xlu0 %1169
      %1171 = vrot.lane.b32.xlu0 %v1155, 16
      %v1172 = vpop.permute.xlu0 %1171
      %1173 = vrot.lane.b32.xlu0 %v1156, 16
      %v1174 = vpop.permute.xlu0 %1173
      %v1175 = vsel %vm712, %v1160, %v1168
      %v1176 = vsel %vm712, %v1162, %v1170
      %v1177 = vsel %vm712, %v1164, %v1172
      %v1178 = vsel %vm712, %v1166, %v1174
      %v1179 = vmin.f32 %v1153, %v1175
      %v1180 = vmin.f32 %v1154, %v1176
      %v1181 = vmin.f32 %v1155, %v1177
      %v1182 = vmin.f32 %v1156, %v1178
      %v1183 = vmax.f32 %v1153, %v1175
      %v1184 = vmax.f32 %v1154, %v1176
      %v1185 = vmax.f32 %v1155, %v1177
      %v1186 = vmax.f32 %v1156, %v1178
      %v1187 = vsel %vm1158, 1, 0
      %vm1188 = vcmp.eq.s32.totalorder %v1187, 1
      %v1189 = vsel %vm1188, %v1179, %v1183
      %v1190 = vsel %vm1188, %v1180, %v1184
      %v1191 = vsel %vm1188, %v1181, %v1185
      %v1192 = vsel %vm1188, %v1182, %v1186
      %vm1193 = vmxor %vm432, %vm1096
      %vm1194 = vmxor %vm1193, 1
      %1195 = vrot.lane.b32.xlu0 %v1189, 120
      %v1196 = vpop.permute.xlu0 %1195
      %1197 = vrot.lane.b32.xlu0 %v1190, 120
      %v1198 = vpop.permute.xlu0 %1197
      %1199 = vrot.lane.b32.xlu0 %v1191, 120
      %v1200 = vpop.permute.xlu0 %1199
      %1201 = vrot.lane.b32.xlu0 %v1192, 120
      %v1202 = vpop.permute.xlu0 %1201
      %1203 = vrot.lane.b32.xlu0 %v1189, 8
      %v1204 = vpop.permute.xlu0 %1203
      %1205 = vrot.lane.b32.xlu0 %v1190, 8
      %v1206 = vpop.permute.xlu0 %1205
      %1207 = vrot.lane.b32.xlu0 %v1191, 8
      %v1208 = vpop.permute.xlu0 %1207
      %1209 = vrot.lane.b32.xlu0 %v1192, 8
      %v1210 = vpop.permute.xlu0 %1209
      %v1211 = vsel %vm564, %v1196, %v1204
      %v1212 = vsel %vm564, %v1198, %v1206
      %v1213 = vsel %vm564, %v1200, %v1208
      %v1214 = vsel %vm564, %v1202, %v1210
      %v1215 = vmin.f32 %v1189, %v1211
      %v1216 = vmin.f32 %v1190, %v1212
      %v1217 = vmin.f32 %v1191, %v1213
      %v1218 = vmin.f32 %v1192, %v1214
      %v1219 = vmax.f32 %v1189, %v1211
      %v1220 = vmax.f32 %v1190, %v1212
      %v1221 = vmax.f32 %v1191, %v1213
      %v1222 = vmax.f32 %v1192, %v1214
      %v1223 = vsel %vm1194, 1, 0
      %vm1224 = vcmp.eq.s32.totalorder %v1223, 1
      %v1225 = vsel %vm1224, %v1215, %v1219
      %v1226 = vsel %vm1224, %v1216, %v1220
      %v1227 = vsel %vm1224, %v1217, %v1221
      %v1228 = vsel %vm1224, %v1218, %v1222
      %vm1229 = vmxor %vm356, %vm1096
      %vm1230 = vmxor %vm1229, 1
      %1231 = vrot.lane.b32.xlu0 %v1225, 124
      %v1232 = vpop.permute.xlu0 %1231
      %1233 = vrot.lane.b32.xlu0 %v1226, 124
      %v1234 = vpop.permute.xlu0 %1233
      %1235 = vrot.lane.b32.xlu0 %v1227, 124
      %v1236 = vpop.permute.xlu0 %1235
      %1237 = vrot.lane.b32.xlu0 %v1228, 124
      %v1238 = vpop.permute.xlu0 %1237
      %1239 = vrot.lane.b32.xlu0 %v1225, 4
      %v1240 = vpop.permute.xlu0 %1239
      %1241 = vrot.lane.b32.xlu0 %v1226, 4
      %v1242 = vpop.permute.xlu0 %1241
      %1243 = vrot.lane.b32.xlu0 %v1227, 4
      %v1244 = vpop.permute.xlu0 %1243
      %1245 = vrot.lane.b32.xlu0 %v1228, 4
      %v1246 = vpop.permute.xlu0 %1245
      %v1247 = vsel %vm452, %v1232, %v1240
      %v1248 = vsel %vm452, %v1234, %v1242
      %v1249 = vsel %vm452, %v1236, %v1244
      %v1250 = vsel %vm452, %v1238, %v1246
      %v1251 = vmin.f32 %v1225, %v1247
      %v1252 = vmin.f32 %v1226, %v1248
      %v1253 = vmin.f32 %v1227, %v1249
      %v1254 = vmin.f32 %v1228, %v1250
      %v1255 = vmax.f32 %v1225, %v1247
      %v1256 = vmax.f32 %v1226, %v1248
      %v1257 = vmax.f32 %v1227, %v1249
      %v1258 = vmax.f32 %v1228, %v1250
      %v1259 = vsel %vm1230, 1, 0
      %vm1260 = vcmp.eq.s32.totalorder %v1259, 1
      %v1261 = vsel %vm1260, %v1251, %v1255
      %v1262 = vsel %vm1260, %v1252, %v1256
      %v1263 = vsel %vm1260, %v1253, %v1257
      %v1264 = vsel %vm1260, %v1254, %v1258
      %vm1265 = vmxor %vm316, %vm1096
      %vm1266 = vmxor %vm1265, 1
      %1267 = vrot.lane.b32.xlu0 %v1261, 126
      %v1268 = vpop.permute.xlu0 %1267
      %1269 = vrot.lane.b32.xlu0 %v1262, 126
      %v1270 = vpop.permute.xlu0 %1269
      %1271 = vrot.lane.b32.xlu0 %v1263, 126
      %v1272 = vpop.permute.xlu0 %1271
      %1273 = vrot.lane.b32.xlu0 %v1264, 126
      %v1274 = vpop.permute.xlu0 %1273
      %1275 = vrot.lane.b32.xlu0 %v1261, 2
      %v1276 = vpop.permute.xlu0 %1275
      %1277 = vrot.lane.b32.xlu0 %v1262, 2
      %v1278 = vpop.permute.xlu0 %1277
      %1279 = vrot.lane.b32.xlu0 %v1263, 2
      %v1280 = vpop.permute.xlu0 %1279
      %1281 = vrot.lane.b32.xlu0 %v1264, 2
      %v1282 = vpop.permute.xlu0 %1281
      %v1283 = vsel %vm376, %v1268, %v1276
      %v1284 = vsel %vm376, %v1270, %v1278
      %v1285 = vsel %vm376, %v1272, %v1280
      %v1286 = vsel %vm376, %v1274, %v1282
      %v1287 = vmin.f32 %v1261, %v1283
      %v1288 = vmin.f32 %v1262, %v1284
      %v1289 = vmin.f32 %v1263, %v1285
      %v1290 = vmin.f32 %v1264, %v1286
      %v1291 = vmax.f32 %v1261, %v1283
      %v1292 = vmax.f32 %v1262, %v1284
      %v1293 = vmax.f32 %v1263, %v1285
      %v1294 = vmax.f32 %v1264, %v1286
      %v1295 = vsel %vm1266, 1, 0
      %vm1296 = vcmp.eq.s32.totalorder %v1295, 1
      %v1297 = vsel %vm1296, %v1287, %v1291
      %v1298 = vsel %vm1296, %v1288, %v1292
      %v1299 = vsel %vm1296, %v1289, %v1293
      %v1300 = vsel %vm1296, %v1290, %v1294
      %vm1301 = vmxor %vm314, %vm1096
      %vm1302 = vmxor %vm1301, 1
      %1303 = vrot.lane.b32.xlu0 %v1297, 127
      %v1304 = vpop.permute.xlu0 %1303
      %1305 = vrot.lane.b32.xlu0 %v1298, 127
      %v1306 = vpop.permute.xlu0 %1305
      %1307 = vrot.lane.b32.xlu0 %v1299, 127
      %v1308 = vpop.permute.xlu0 %1307
      %1309 = vrot.lane.b32.xlu0 %v1300, 127
      %v1310 = vpop.permute.xlu0 %1309
      %1311 = vrot.lane.b32.xlu0 %v1297, 1
      %v1312 = vpop.permute.xlu0 %1311
      %1313 = vrot.lane.b32.xlu0 %v1298, 1
      %v1314 = vpop.permute.xlu0 %1313
      %1315 = vrot.lane.b32.xlu0 %v1299, 1
      %v1316 = vpop.permute.xlu0 %1315
      %1317 = vrot.lane.b32.xlu0 %v1300, 1
      %v1318 = vpop.permute.xlu0 %1317
      %v1319 = vsel %vm336, %v1304, %v1312
      %v1320 = vsel %vm336, %v1306, %v1314
      %v1321 = vsel %vm336, %v1308, %v1316
      %v1322 = vsel %vm336, %v1310, %v1318
      %v1323 = vmin.f32 %v1297, %v1319
      %v1324 = vmin.f32 %v1298, %v1320
      %v1325 = vmin.f32 %v1299, %v1321
      %v1326 = vmin.f32 %v1300, %v1322
      %v1327 = vmax.f32 %v1297, %v1319
      %v1328 = vmax.f32 %v1298, %v1320
      %v1329 = vmax.f32 %v1299, %v1321
      %v1330 = vmax.f32 %v1300, %v1322
      %v1331 = vsel %vm1302, 1, 0
      %vm1332 = vcmp.eq.s32.totalorder %v1331, 1
      %v1333 = vsel %vm1332, %v1323, %v1327
      %v1334 = vsel %vm1332, %v1324, %v1328
      %v1335 = vsel %vm1332, %v1325, %v1329
      %v1336 = vsel %vm1332, %v1326, %v1330
      %v1337 = vsub.f32 %v1333, %v1335
      %v1338 = vsub.f32 %v1334, %v1336
      %v1339 = vmul.f32 %v1337, %v1337
      %v1340 = vmul.f32 %v1338, %v1338
      %1341 = vadd.xlane.f32.xlu0 %v1339
      %v1342 = vpop.xlane.xlu0 %1341
      %1343 = vadd.xlane.f32.xlu0 %v1340
      %v1344 = vpop.xlane.xlu0 %1343
      %v1345 = vadd.f32 %v1342, %v1344
      %v1346 = vrot.slane %v1345, 4
      %v1347 = vadd.f32 %v1345, %v1346
      %v1348 = vrot.slane %v1347, 2
      %v1349 = vadd.f32 %v1347, %v1348
      %v1350 = vrot.slane %v1349, 1
      %v1351 = vadd.f32 %v1349, %v1350
      %v1352 = vmul.f32 %v1351, 0.00048828125
      %vm1353 = vcmask 0
      %1354 = vst.msk [vmem:[%s236] sm:$0x1] %vm1353, %v1352
      %p1355 = scmp.lt.s32.totalorder %s18, 1
      %s1356 = scalar_select %p1355, %s18, 1
      %p1357 = scmp.lt.s32.totalorder %s19, 0
      %s1358 = scalar_select %p1357, %s19, 0
      %s1359 = sadd.s32 %s1358, %s1356
      %s1360 = scalar_lea.vmem %s3, %s1359
      // Predicated region
      $region33: #{tpu_custom_call.1} parent=31 // pred_check
        %p1361 = pneg %p126
      $region34: #{tpu_custom_call.1} parent=31 // pred_check_branch
        %1363 = sbr.rel (%p1361) target = $region36
      $region35: #{tpu_custom_call.1} parent=31 // pred_region
        _
      $region36: #{tpu_custom_call.1} parent=31 // pred_fallthru
        _
    $region32: #{tpu_custom_call.1} parent=5 // pred_fallthru
      _
    %p1364 = scmp.le.s32.totalorder 2, %s9
    // Predicated region
    $region37: #{tpu_custom_call.1} parent=5 // pred_check
      %p1365 = pneg %p1364
    $region38: #{tpu_custom_call.1} parent=5 // pred_check_branch
      %1367 = sbr.rel (%p1365) target = $region40
    $region39: #{tpu_custom_call.1} parent=5 // pred_region
      %s1368 = ssub.s32 %s9, 2
      // Predicated region
      $region41: #{tpu_custom_call.1} parent=39 // pred_check
        %p1369 = pneg %p132
      $region42: #{tpu_custom_call.1} parent=39 // pred_check_branch
        %1371 = sbr.rel (%p1369) target = $region44
      $region43: #{tpu_custom_call.1} parent=39 // pred_region
        %p1372 = scmp.lt.s32.totalorder %s20, 1
        %s1373 = scalar_select %p1372, %s20, 1
        %p1374 = scmp.lt.s32.totalorder %s21, 0
        %s1375 = scalar_select %p1374, %s21, 0
        %s1376 = sadd.s32 %s1375, %s1373
        %s1377 = scalar_lea.vmem %s3, %s1376
      $region44: #{tpu_custom_call.1} parent=39 // pred_fallthru
        _
    $region40: #{tpu_custom_call.1} parent=5 // pred_fallthru
      _
  $region6: #{tpu_custom_call.1} parent=0 // loop_footer
    %s13 = sadd.s32 1, %s9
  $region7: #{tpu_custom_call.1} parent=0 // loop_footer_branch
    %8 = sbr.rel target = $region3
  $region8: #{tpu_custom_call.1} parent=0 // loop_exit
    _

</llo_original>
